<compile_context>
chip_gen: v7x
topology: tpu7x:2x2x1
jax: 0.10.0
libtpu: 0.0.40
codegen_flags: <defaults>
</compile_context>

<pallas_src>
import functools

import jax
import jax.numpy as jnp
from jax.experimental import pallas as pl
from jax.experimental.pallas import tpu as pltpu

K = 3            # kernel size
GROUPS = 2
C_IN = 8
C_OUT = 8
CIN_G = C_IN // GROUPS     # 4 input channels per group
COUT_G = C_OUT // GROUPS   # 4 output channels per group


def grouped_conv2d_kernel(x_ref, w_ref, b_ref, o_ref, *, width, n_tile):
    # x_ref : VMEM (GROUPS, n_tile*CIN_G, H*W)   rows are n-major: r = n*CIN_G + ci
    # w_ref : VMEM (C_OUT, K*K, n_tile*CIN_G, 1) per-sublane weight columns
    # b_ref : SMEM (C_OUT,)                      bias scalars
    # o_ref : VMEM (n_tile, C_OUT, H*W)          only p = i*W + j with i<Ho, j<Wo valid
    hw = x_ref.shape[-1]

    for g in range(GROUPS):
        # This group's packed slab: loaded once, reused for every tap and every
        # output channel of the group.  Sublane dim is full (n_tile*CIN_G = 8k).
        xg = x_ref[g].astype(jnp.float32)

        # One per-sublane f32 accumulator per output channel of this group.
        accs = [jnp.zeros((n_tile * CIN_G, hw), jnp.float32)
                for _ in range(COUT_G)]

        for kh in range(K):
            for kw in range(K):
                s = kh * width + kw          # flat spatial shift of this tap
                t = kh * K + kw
                # One lane roll per tap per group (XLU slot; overlaps the VALU
                # FMAs):  shifted[r, p] == xg[r, p + s] for every valid p.
                # Wrapped values only land in positions the wrapper crops away.
                shifted = xg if s == 0 else pltpu.roll(xg, hw - s, 1)
                for co in range(COUT_G):
                    # Full-vreg FMA against the (n_tile*CIN_G, 1) weight column.
                    accs[co] = accs[co] + shifted * w_ref[g * COUT_G + co, t]

        # Reduce the CIN_G sublane rows of each image once per output channel,
        # add bias, and store this whole group's channels with one fused,
        # lane-dense slab store (only one group's accumulators live at a time).
        per_image = []
        for nl in range(n_tile):
            rows = []
            for co in range(COUT_G):
                oc = g * COUT_G + co
                r = jnp.sum(accs[co][nl * CIN_G:(nl + 1) * CIN_G, :],
                            axis=0, keepdims=True)          # (1, H*W)
                rows.append(r + b_ref[oc])
            per_image.append(jnp.concatenate(rows, axis=0))  # (COUT_G, H*W)
        group_out = jnp.stack(per_image, axis=0)              # (n_tile, COUT_G, H*W)
        o_ref[:, g * COUT_G:(g + 1) * COUT_G, :] = group_out.astype(o_ref.dtype)


def _pick_n_tile(n, hw):
    # Per-step VMEM bytes ~ 2 (double buffer) * 4 B * hw * (C_IN + C_OUT) per
    # image.  Keep each double-buffered pair under ~4 MiB so we sit well inside
    # every generation's scoped-VMEM default (v5e 16 MiB, v6e/v7x 32 MiB scoped
    # / v7x 64 MiB physical), and cap at 8 images/step to bound live vregs.
    budget = 4 << 20
    per_image = 2 * 4 * hw * (C_IN + C_OUT)
    t = max(int(budget // per_image), 1)
    t = min(t, 8, max(n, 1))
    t = max(2 * (t // 2), 2)          # even, so n_tile*CIN_G is a multiple of 8
    return t


def grouped_conv2d(x, weight, bias):
    """x: (N, 8, H, W) f32; weight: (8, 4, 3, 3) PyTorch OIHW; bias: (8,)."""
    n, c, h, w = x.shape
    assert c == C_IN and h >= K and w >= K
    ho, wo = h - K + 1, w - K + 1
    hw = h * w

    n_tile = _pick_n_tile(n, hw)
    n_pad = (-n) % n_tile
    if n_pad:
        x = jnp.pad(x, ((0, n_pad), (0, 0), (0, 0), (0, 0)))
    n_total = n + n_pad

    # Layout plumbing (XLA side): pack each group's channels into the sublane
    # dim next to N:  x_packed[g, n*CIN_G + ci, i*W + j] = x[n, g*CIN_G + ci, i, j].
    # An N-tile is then a contiguous, sublane-full block of n_tile*CIN_G rows.
    x_packed = (x.reshape(n_total, GROUPS, CIN_G, hw)
                 .transpose(1, 0, 2, 3)
                 .reshape(GROUPS, n_total * CIN_G, hw))

    # Pre-expanded per-sublane weight columns:
    #   w_cols[oc, t, n*CIN_G + ci, 0] = weight[oc, ci, t // K, t % K]
    w_cols = jnp.transpose(weight.reshape(C_OUT, CIN_G, K * K), (0, 2, 1))  # (oc, t, ci)
    w_cols = jnp.tile(w_cols[:, :, None, :], (1, 1, n_tile, 1))
    w_cols = w_cols.reshape(C_OUT, K * K, n_tile * CIN_G, 1)

    grid = (n_total // n_tile,)

    flops = 2 * n_total * C_OUT * ho * wo * CIN_G * K * K
    bytes_accessed = 4 * (x_packed.size + w_cols.size + bias.size
                          + n_total * C_OUT * hw)

    out_r = pl.pallas_call(
        functools.partial(grouped_conv2d_kernel, width=w, n_tile=n_tile),
        out_shape=jax.ShapeDtypeStruct((n_total, C_OUT, hw), x.dtype),
        grid_spec=pltpu.PrefetchScalarGridSpec(
            num_scalar_prefetch=0,
            grid=grid,
            in_specs=[
                # x: tile over N (contiguous n_tile*CIN_G rows per group)
                pl.BlockSpec((GROUPS, n_tile * CIN_G, hw), lambda i: (0, i, 0)),
                # weights: whole small array, resident in VMEM
                pl.BlockSpec((C_OUT, K * K, n_tile * CIN_G, 1),
                             lambda i: (0, 0, 0, 0)),
                # bias: 8 scalars in SMEM
                pl.BlockSpec(memory_space=pltpu.MemorySpace.SMEM),
            ],
            out_specs=pl.BlockSpec((n_tile, C_OUT, hw), lambda i: (i, 0, 0)),
        ),
        compiler_params=pltpu.CompilerParams(
            dimension_semantics=("parallel",)),
        cost_estimate=pl.CostEstimate(
            flops=flops, transcendentals=0, bytes_accessed=bytes_accessed),
    )(x_packed, w_cols, bias)

    # Output is already batch-major (N, C_OUT, H*W): reshape is free, only the
    # VALID crop (and padded-batch crop) remains.
    out = out_r.reshape(n_total, C_OUT, h, w)[:n, :, :ho, :wo]
    return out


if __name__ == "__main__":
    key = jax.random.PRNGKey(0)
    kx, kw_, kb = jax.random.split(key, 3)

    # Small shapes consistent with the module: NCHW, 8 channels fixed by the conv.
    N, H, W = 2, 16, 16
    x = jax.random.normal(kx, (N, C_IN, H, W), dtype=jnp.float32)

    # Deterministic Conv2d-style init (uniform in +-1/sqrt(fan_in)).
    fan_in = CIN_G * K * K
    bound = 1.0 / (fan_in ** 0.5)
    weight = jax.random.uniform(kw_, (C_OUT, CIN_G, K, K), jnp.float32, -bound, bound)
    bias = jax.random.uniform(kb, (C_OUT,), jnp.float32, -bound, bound)

    out = jax.block_until_ready(grouped_conv2d(x, weight, bias))

    # Reference: XLA grouped conv + bias.
    ref = jax.lax.conv_general_dilated(
        x, weight, window_strides=(1, 1), padding="VALID",
        dimension_numbers=("NCHW", "OIHW", "NCHW"),
        feature_group_count=GROUPS)
    ref = ref + bias[None, :, None, None]

    assert out.shape == (N, C_OUT, H - K + 1, W - K + 1), out.shape
    assert jnp.allclose(out, ref, atol=1e-5, rtol=1e-5), "mismatch vs reference conv"
    print("KERNEL_OK")
</pallas_src>

<mosaic_0001>
module attributes {stable_mosaic.version = 11 : i64} {
  func.func @grouped_conv2d_kernel(%arg0: i32, %arg1: memref<2x8x256xf32, #tpu.memory_space<vmem>>, %arg2: memref<8x9x8x1xf32, #tpu.memory_space<vmem>>, %arg3: memref<8xf32, #tpu.memory_space<smem>>, %arg4: memref<2x8x256xf32, #tpu.memory_space<vmem>>) attributes {dimension_semantics = [#tpu.dimension_semantics<parallel>], iteration_bounds = array<i64: 1>, scalar_prefetch = 0 : i64, scratch_operands = 0 : i64, tpu.core_type = #tpu.core_type<tc>, window_params = [{transform_indices = @transform_0, window_bounds = array<i64: 2, 8, 256>}, {pipeline_mode = #tpu.pipeline_mode<synchronous>, transform_indices = @transform_1, window_bounds = array<i64: 8, 9, 8, 1>}, {transform_indices = @transform_2, window_bounds = array<i64: 8>}, {transform_indices = @transform_3, window_bounds = array<i64: 2, 8, 256>}]} {
    %c0 = arith.constant 0 : index
    %c0_0 = arith.constant 0 : index
    %c0_1 = arith.constant 0 : index
    %0 = vector.load %arg1[%c0, %c0_0, %c0_1] : memref<2x8x256xf32, #tpu.memory_space<vmem>>, vector<1x8x256xf32>
    %1 = vector.shape_cast %0 : vector<1x8x256xf32> to vector<8x256xf32>
    %cst = arith.constant 0.000000e+00 : f32
    %2 = vector.broadcast %cst : f32 to vector<8x256xf32>
    %cst_2 = arith.constant 0.000000e+00 : f32
    %3 = vector.broadcast %cst_2 : f32 to vector<8x256xf32>
    %cst_3 = arith.constant 0.000000e+00 : f32
    %4 = vector.broadcast %cst_3 : f32 to vector<8x256xf32>
    %cst_4 = arith.constant 0.000000e+00 : f32
    %5 = vector.broadcast %cst_4 : f32 to vector<8x256xf32>
    %c0_5 = arith.constant 0 : index
    %c0_6 = arith.constant 0 : index
    %c0_7 = arith.constant 0 : index
    %c0_8 = arith.constant 0 : index
    %6 = vector.load %arg2[%c0_5, %c0_6, %c0_7, %c0_8] : memref<8x9x8x1xf32, #tpu.memory_space<vmem>>, vector<1x1x8x1xf32>
    %7 = vector.shape_cast %6 : vector<1x1x8x1xf32> to vector<8x1xf32>
    %8 = vector.broadcast %7 : vector<8x1xf32> to vector<8x256xf32>
    %9 = arith.mulf %1, %8 : vector<8x256xf32>
    %10 = arith.addf %2, %9 : vector<8x256xf32>
    %c1 = arith.constant 1 : index
    %c0_9 = arith.constant 0 : index
    %c0_10 = arith.constant 0 : index
    %c0_11 = arith.constant 0 : index
    %11 = vector.load %arg2[%c1, %c0_9, %c0_10, %c0_11] : memref<8x9x8x1xf32, #tpu.memory_space<vmem>>, vector<1x1x8x1xf32>
    %12 = vector.shape_cast %11 : vector<1x1x8x1xf32> to vector<8x1xf32>
    %13 = vector.broadcast %12 : vector<8x1xf32> to vector<8x256xf32>
    %14 = arith.mulf %1, %13 : vector<8x256xf32>
    %15 = arith.addf %3, %14 : vector<8x256xf32>
    %c2 = arith.constant 2 : index
    %c0_12 = arith.constant 0 : index
    %c0_13 = arith.constant 0 : index
    %c0_14 = arith.constant 0 : index
    %16 = vector.load %arg2[%c2, %c0_12, %c0_13, %c0_14] : memref<8x9x8x1xf32, #tpu.memory_space<vmem>>, vector<1x1x8x1xf32>
    %17 = vector.shape_cast %16 : vector<1x1x8x1xf32> to vector<8x1xf32>
    %18 = vector.broadcast %17 : vector<8x1xf32> to vector<8x256xf32>
    %19 = arith.mulf %1, %18 : vector<8x256xf32>
    %20 = arith.addf %4, %19 : vector<8x256xf32>
    %c3 = arith.constant 3 : index
    %c0_15 = arith.constant 0 : index
    %c0_16 = arith.constant 0 : index
    %c0_17 = arith.constant 0 : index
    %21 = vector.load %arg2[%c3, %c0_15, %c0_16, %c0_17] : memref<8x9x8x1xf32, #tpu.memory_space<vmem>>, vector<1x1x8x1xf32>
    %22 = vector.shape_cast %21 : vector<1x1x8x1xf32> to vector<8x1xf32>
    %23 = vector.broadcast %22 : vector<8x1xf32> to vector<8x256xf32>
    %24 = arith.mulf %1, %23 : vector<8x256xf32>
    %25 = arith.addf %5, %24 : vector<8x256xf32>
    %c255_i32 = arith.constant 255 : i32
    %26 = tpu.dynamic_rotate %1 by %c255_i32 dim 1 : vector<8x256xf32>, i32 -> vector<8x256xf32>
    %c0_18 = arith.constant 0 : index
    %c1_19 = arith.constant 1 : index
    %c0_20 = arith.constant 0 : index
    %c0_21 = arith.constant 0 : index
    %27 = vector.load %arg2[%c0_18, %c1_19, %c0_20, %c0_21] : memref<8x9x8x1xf32, #tpu.memory_space<vmem>>, vector<1x1x8x1xf32>
    %28 = vector.shape_cast %27 : vector<1x1x8x1xf32> to vector<8x1xf32>
    %29 = vector.broadcast %28 : vector<8x1xf32> to vector<8x256xf32>
    %30 = arith.mulf %26, %29 : vector<8x256xf32>
    %31 = arith.addf %10, %30 : vector<8x256xf32>
    %c1_22 = arith.constant 1 : index
    %c1_23 = arith.constant 1 : index
    %c0_24 = arith.constant 0 : index
    %c0_25 = arith.constant 0 : index
    %32 = vector.load %arg2[%c1_22, %c1_23, %c0_24, %c0_25] : memref<8x9x8x1xf32, #tpu.memory_space<vmem>>, vector<1x1x8x1xf32>
    %33 = vector.shape_cast %32 : vector<1x1x8x1xf32> to vector<8x1xf32>
    %34 = vector.broadcast %33 : vector<8x1xf32> to vector<8x256xf32>
    %35 = arith.mulf %26, %34 : vector<8x256xf32>
    %36 = arith.addf %15, %35 : vector<8x256xf32>
    %c2_26 = arith.constant 2 : index
    %c1_27 = arith.constant 1 : index
    %c0_28 = arith.constant 0 : index
    %c0_29 = arith.constant 0 : index
    %37 = vector.load %arg2[%c2_26, %c1_27, %c0_28, %c0_29] : memref<8x9x8x1xf32, #tpu.memory_space<vmem>>, vector<1x1x8x1xf32>
    %38 = vector.shape_cast %37 : vector<1x1x8x1xf32> to vector<8x1xf32>
    %39 = vector.broadcast %38 : vector<8x1xf32> to vector<8x256xf32>
    %40 = arith.mulf %26, %39 : vector<8x256xf32>
    %41 = arith.addf %20, %40 : vector<8x256xf32>
    %c3_30 = arith.constant 3 : index
    %c1_31 = arith.constant 1 : index
    %c0_32 = arith.constant 0 : index
    %c0_33 = arith.constant 0 : index
    %42 = vector.load %arg2[%c3_30, %c1_31, %c0_32, %c0_33] : memref<8x9x8x1xf32, #tpu.memory_space<vmem>>, vector<1x1x8x1xf32>
    %43 = vector.shape_cast %42 : vector<1x1x8x1xf32> to vector<8x1xf32>
    %44 = vector.broadcast %43 : vector<8x1xf32> to vector<8x256xf32>
    %45 = arith.mulf %26, %44 : vector<8x256xf32>
    %46 = arith.addf %25, %45 : vector<8x256xf32>
    %c254_i32 = arith.constant 254 : i32
    %47 = tpu.dynamic_rotate %1 by %c254_i32 dim 1 : vector<8x256xf32>, i32 -> vector<8x256xf32>
    %c0_34 = arith.constant 0 : index
    %c2_35 = arith.constant 2 : index
    %c0_36 = arith.constant 0 : index
    %c0_37 = arith.constant 0 : index
    %48 = vector.load %arg2[%c0_34, %c2_35, %c0_36, %c0_37] : memref<8x9x8x1xf32, #tpu.memory_space<vmem>>, vector<1x1x8x1xf32>
    %49 = vector.shape_cast %48 : vector<1x1x8x1xf32> to vector<8x1xf32>
    %50 = vector.broadcast %49 : vector<8x1xf32> to vector<8x256xf32>
    %51 = arith.mulf %47, %50 : vector<8x256xf32>
    %52 = arith.addf %31, %51 : vector<8x256xf32>
    %c1_38 = arith.constant 1 : index
    %c2_39 = arith.constant 2 : index
    %c0_40 = arith.constant 0 : index
    %c0_41 = arith.constant 0 : index
    %53 = vector.load %arg2[%c1_38, %c2_39, %c0_40, %c0_41] : memref<8x9x8x1xf32, #tpu.memory_space<vmem>>, vector<1x1x8x1xf32>
    %54 = vector.shape_cast %53 : vector<1x1x8x1xf32> to vector<8x1xf32>
    %55 = vector.broadcast %54 : vector<8x1xf32> to vector<8x256xf32>
    %56 = arith.mulf %47, %55 : vector<8x256xf32>
    %57 = arith.addf %36, %56 : vector<8x256xf32>
    %c2_42 = arith.constant 2 : index
    %c2_43 = arith.constant 2 : index
    %c0_44 = arith.constant 0 : index
    %c0_45 = arith.constant 0 : index
    %58 = vector.load %arg2[%c2_42, %c2_43, %c0_44, %c0_45] : memref<8x9x8x1xf32, #tpu.memory_space<vmem>>, vector<1x1x8x1xf32>
    %59 = vector.shape_cast %58 : vector<1x1x8x1xf32> to vector<8x1xf32>
    %60 = vector.broadcast %59 : vector<8x1xf32> to vector<8x256xf32>
    %61 = arith.mulf %47, %60 : vector<8x256xf32>
    %62 = arith.addf %41, %61 : vector<8x256xf32>
    %c3_46 = arith.constant 3 : index
    %c2_47 = arith.constant 2 : index
    %c0_48 = arith.constant 0 : index
    %c0_49 = arith.constant 0 : index
    %63 = vector.load %arg2[%c3_46, %c2_47, %c0_48, %c0_49] : memref<8x9x8x1xf32, #tpu.memory_space<vmem>>, vector<1x1x8x1xf32>
    %64 = vector.shape_cast %63 : vector<1x1x8x1xf32> to vector<8x1xf32>
    %65 = vector.broadcast %64 : vector<8x1xf32> to vector<8x256xf32>
    %66 = arith.mulf %47, %65 : vector<8x256xf32>
    %67 = arith.addf %46, %66 : vector<8x256xf32>
    %c240_i32 = arith.constant 240 : i32
    %68 = tpu.dynamic_rotate %1 by %c240_i32 dim 1 : vector<8x256xf32>, i32 -> vector<8x256xf32>
    %c0_50 = arith.constant 0 : index
    %c3_51 = arith.constant 3 : index
    %c0_52 = arith.constant 0 : index
    %c0_53 = arith.constant 0 : index
    %69 = vector.load %arg2[%c0_50, %c3_51, %c0_52, %c0_53] : memref<8x9x8x1xf32, #tpu.memory_space<vmem>>, vector<1x1x8x1xf32>
    %70 = vector.shape_cast %69 : vector<1x1x8x1xf32> to vector<8x1xf32>
    %71 = vector.broadcast %70 : vector<8x1xf32> to vector<8x256xf32>
    %72 = arith.mulf %68, %71 : vector<8x256xf32>
    %73 = arith.addf %52, %72 : vector<8x256xf32>
    %c1_54 = arith.constant 1 : index
    %c3_55 = arith.constant 3 : index
    %c0_56 = arith.constant 0 : index
    %c0_57 = arith.constant 0 : index
    %74 = vector.load %arg2[%c1_54, %c3_55, %c0_56, %c0_57] : memref<8x9x8x1xf32, #tpu.memory_space<vmem>>, vector<1x1x8x1xf32>
    %75 = vector.shape_cast %74 : vector<1x1x8x1xf32> to vector<8x1xf32>
    %76 = vector.broadcast %75 : vector<8x1xf32> to vector<8x256xf32>
    %77 = arith.mulf %68, %76 : vector<8x256xf32>
    %78 = arith.addf %57, %77 : vector<8x256xf32>
    %c2_58 = arith.constant 2 : index
    %c3_59 = arith.constant 3 : index
    %c0_60 = arith.constant 0 : index
    %c0_61 = arith.constant 0 : index
    %79 = vector.load %arg2[%c2_58, %c3_59, %c0_60, %c0_61] : memref<8x9x8x1xf32, #tpu.memory_space<vmem>>, vector<1x1x8x1xf32>
    %80 = vector.shape_cast %79 : vector<1x1x8x1xf32> to vector<8x1xf32>
    %81 = vector.broadcast %80 : vector<8x1xf32> to vector<8x256xf32>
    %82 = arith.mulf %68, %81 : vector<8x256xf32>
    %83 = arith.addf %62, %82 : vector<8x256xf32>
    %c3_62 = arith.constant 3 : index
    %c3_63 = arith.constant 3 : index
    %c0_64 = arith.constant 0 : index
    %c0_65 = arith.constant 0 : index
    %84 = vector.load %arg2[%c3_62, %c3_63, %c0_64, %c0_65] : memref<8x9x8x1xf32, #tpu.memory_space<vmem>>, vector<1x1x8x1xf32>
    %85 = vector.shape_cast %84 : vector<1x1x8x1xf32> to vector<8x1xf32>
    %86 = vector.broadcast %85 : vector<8x1xf32> to vector<8x256xf32>
    %87 = arith.mulf %68, %86 : vector<8x256xf32>
    %88 = arith.addf %67, %87 : vector<8x256xf32>
    %c239_i32 = arith.constant 239 : i32
    %89 = tpu.dynamic_rotate %1 by %c239_i32 dim 1 : vector<8x256xf32>, i32 -> vector<8x256xf32>
    %c0_66 = arith.constant 0 : index
    %c4 = arith.constant 4 : index
    %c0_67 = arith.constant 0 : index
    %c0_68 = arith.constant 0 : index
    %90 = vector.load %arg2[%c0_66, %c4, %c0_67, %c0_68] : memref<8x9x8x1xf32, #tpu.memory_space<vmem>>, vector<1x1x8x1xf32>
    %91 = vector.shape_cast %90 : vector<1x1x8x1xf32> to vector<8x1xf32>
    %92 = vector.broadcast %91 : vector<8x1xf32> to vector<8x256xf32>
    %93 = arith.mulf %89, %92 : vector<8x256xf32>
    %94 = arith.addf %73, %93 : vector<8x256xf32>
    %c1_69 = arith.constant 1 : index
    %c4_70 = arith.constant 4 : index
    %c0_71 = arith.constant 0 : index
    %c0_72 = arith.constant 0 : index
    %95 = vector.load %arg2[%c1_69, %c4_70, %c0_71, %c0_72] : memref<8x9x8x1xf32, #tpu.memory_space<vmem>>, vector<1x1x8x1xf32>
    %96 = vector.shape_cast %95 : vector<1x1x8x1xf32> to vector<8x1xf32>
    %97 = vector.broadcast %96 : vector<8x1xf32> to vector<8x256xf32>
    %98 = arith.mulf %89, %97 : vector<8x256xf32>
    %99 = arith.addf %78, %98 : vector<8x256xf32>
    %c2_73 = arith.constant 2 : index
    %c4_74 = arith.constant 4 : index
    %c0_75 = arith.constant 0 : index
    %c0_76 = arith.constant 0 : index
    %100 = vector.load %arg2[%c2_73, %c4_74, %c0_75, %c0_76] : memref<8x9x8x1xf32, #tpu.memory_space<vmem>>, vector<1x1x8x1xf32>
    %101 = vector.shape_cast %100 : vector<1x1x8x1xf32> to vector<8x1xf32>
    %102 = vector.broadcast %101 : vector<8x1xf32> to vector<8x256xf32>
    %103 = arith.mulf %89, %102 : vector<8x256xf32>
    %104 = arith.addf %83, %103 : vector<8x256xf32>
    %c3_77 = arith.constant 3 : index
    %c4_78 = arith.constant 4 : index
    %c0_79 = arith.constant 0 : index
    %c0_80 = arith.constant 0 : index
    %105 = vector.load %arg2[%c3_77, %c4_78, %c0_79, %c0_80] : memref<8x9x8x1xf32, #tpu.memory_space<vmem>>, vector<1x1x8x1xf32>
    %106 = vector.shape_cast %105 : vector<1x1x8x1xf32> to vector<8x1xf32>
    %107 = vector.broadcast %106 : vector<8x1xf32> to vector<8x256xf32>
    %108 = arith.mulf %89, %107 : vector<8x256xf32>
    %109 = arith.addf %88, %108 : vector<8x256xf32>
    %c238_i32 = arith.constant 238 : i32
    %110 = tpu.dynamic_rotate %1 by %c238_i32 dim 1 : vector<8x256xf32>, i32 -> vector<8x256xf32>
    %c0_81 = arith.constant 0 : index
    %c5 = arith.constant 5 : index
    %c0_82 = arith.constant 0 : index
    %c0_83 = arith.constant 0 : index
    %111 = vector.load %arg2[%c0_81, %c5, %c0_82, %c0_83] : memref<8x9x8x1xf32, #tpu.memory_space<vmem>>, vector<1x1x8x1xf32>
    %112 = vector.shape_cast %111 : vector<1x1x8x1xf32> to vector<8x1xf32>
    %113 = vector.broadcast %112 : vector<8x1xf32> to vector<8x256xf32>
    %114 = arith.mulf %110, %113 : vector<8x256xf32>
    %115 = arith.addf %94, %114 : vector<8x256xf32>
    %c1_84 = arith.constant 1 : index
    %c5_85 = arith.constant 5 : index
    %c0_86 = arith.constant 0 : index
    %c0_87 = arith.constant 0 : index
    %116 = vector.load %arg2[%c1_84, %c5_85, %c0_86, %c0_87] : memref<8x9x8x1xf32, #tpu.memory_space<vmem>>, vector<1x1x8x1xf32>
    %117 = vector.shape_cast %116 : vector<1x1x8x1xf32> to vector<8x1xf32>
    %118 = vector.broadcast %117 : vector<8x1xf32> to vector<8x256xf32>
    %119 = arith.mulf %110, %118 : vector<8x256xf32>
    %120 = arith.addf %99, %119 : vector<8x256xf32>
    %c2_88 = arith.constant 2 : index
    %c5_89 = arith.constant 5 : index
    %c0_90 = arith.constant 0 : index
    %c0_91 = arith.constant 0 : index
    %121 = vector.load %arg2[%c2_88, %c5_89, %c0_90, %c0_91] : memref<8x9x8x1xf32, #tpu.memory_space<vmem>>, vector<1x1x8x1xf32>
    %122 = vector.shape_cast %121 : vector<1x1x8x1xf32> to vector<8x1xf32>
    %123 = vector.broadcast %122 : vector<8x1xf32> to vector<8x256xf32>
    %124 = arith.mulf %110, %123 : vector<8x256xf32>
    %125 = arith.addf %104, %124 : vector<8x256xf32>
    %c3_92 = arith.constant 3 : index
    %c5_93 = arith.constant 5 : index
    %c0_94 = arith.constant 0 : index
    %c0_95 = arith.constant 0 : index
    %126 = vector.load %arg2[%c3_92, %c5_93, %c0_94, %c0_95] : memref<8x9x8x1xf32, #tpu.memory_space<vmem>>, vector<1x1x8x1xf32>
    %127 = vector.shape_cast %126 : vector<1x1x8x1xf32> to vector<8x1xf32>
    %128 = vector.broadcast %127 : vector<8x1xf32> to vector<8x256xf32>
    %129 = arith.mulf %110, %128 : vector<8x256xf32>
    %130 = arith.addf %109, %129 : vector<8x256xf32>
    %c224_i32 = arith.constant 224 : i32
    %131 = tpu.dynamic_rotate %1 by %c224_i32 dim 1 : vector<8x256xf32>, i32 -> vector<8x256xf32>
    %c0_96 = arith.constant 0 : index
    %c6 = arith.constant 6 : index
    %c0_97 = arith.constant 0 : index
    %c0_98 = arith.constant 0 : index
    %132 = vector.load %arg2[%c0_96, %c6, %c0_97, %c0_98] : memref<8x9x8x1xf32, #tpu.memory_space<vmem>>, vector<1x1x8x1xf32>
    %133 = vector.shape_cast %132 : vector<1x1x8x1xf32> to vector<8x1xf32>
    %134 = vector.broadcast %133 : vector<8x1xf32> to vector<8x256xf32>
    %135 = arith.mulf %131, %134 : vector<8x256xf32>
    %136 = arith.addf %115, %135 : vector<8x256xf32>
    %c1_99 = arith.constant 1 : index
    %c6_100 = arith.constant 6 : index
    %c0_101 = arith.constant 0 : index
    %c0_102 = arith.constant 0 : index
    %137 = vector.load %arg2[%c1_99, %c6_100, %c0_101, %c0_102] : memref<8x9x8x1xf32, #tpu.memory_space<vmem>>, vector<1x1x8x1xf32>
    %138 = vector.shape_cast %137 : vector<1x1x8x1xf32> to vector<8x1xf32>
    %139 = vector.broadcast %138 : vector<8x1xf32> to vector<8x256xf32>
    %140 = arith.mulf %131, %139 : vector<8x256xf32>
    %141 = arith.addf %120, %140 : vector<8x256xf32>
    %c2_103 = arith.constant 2 : index
    %c6_104 = arith.constant 6 : index
    %c0_105 = arith.constant 0 : index
    %c0_106 = arith.constant 0 : index
    %142 = vector.load %arg2[%c2_103, %c6_104, %c0_105, %c0_106] : memref<8x9x8x1xf32, #tpu.memory_space<vmem>>, vector<1x1x8x1xf32>
    %143 = vector.shape_cast %142 : vector<1x1x8x1xf32> to vector<8x1xf32>
    %144 = vector.broadcast %143 : vector<8x1xf32> to vector<8x256xf32>
    %145 = arith.mulf %131, %144 : vector<8x256xf32>
    %146 = arith.addf %125, %145 : vector<8x256xf32>
    %c3_107 = arith.constant 3 : index
    %c6_108 = arith.constant 6 : index
    %c0_109 = arith.constant 0 : index
    %c0_110 = arith.constant 0 : index
    %147 = vector.load %arg2[%c3_107, %c6_108, %c0_109, %c0_110] : memref<8x9x8x1xf32, #tpu.memory_space<vmem>>, vector<1x1x8x1xf32>
    %148 = vector.shape_cast %147 : vector<1x1x8x1xf32> to vector<8x1xf32>
    %149 = vector.broadcast %148 : vector<8x1xf32> to vector<8x256xf32>
    %150 = arith.mulf %131, %149 : vector<8x256xf32>
    %151 = arith.addf %130, %150 : vector<8x256xf32>
    %c223_i32 = arith.constant 223 : i32
    %152 = tpu.dynamic_rotate %1 by %c223_i32 dim 1 : vector<8x256xf32>, i32 -> vector<8x256xf32>
    %c0_111 = arith.constant 0 : index
    %c7 = arith.constant 7 : index
    %c0_112 = arith.constant 0 : index
    %c0_113 = arith.constant 0 : index
    %153 = vector.load %arg2[%c0_111, %c7, %c0_112, %c0_113] : memref<8x9x8x1xf32, #tpu.memory_space<vmem>>, vector<1x1x8x1xf32>
    %154 = vector.shape_cast %153 : vector<1x1x8x1xf32> to vector<8x1xf32>
    %155 = vector.broadcast %154 : vector<8x1xf32> to vector<8x256xf32>
    %156 = arith.mulf %152, %155 : vector<8x256xf32>
    %157 = arith.addf %136, %156 : vector<8x256xf32>
    %c1_114 = arith.constant 1 : index
    %c7_115 = arith.constant 7 : index
    %c0_116 = arith.constant 0 : index
    %c0_117 = arith.constant 0 : index
    %158 = vector.load %arg2[%c1_114, %c7_115, %c0_116, %c0_117] : memref<8x9x8x1xf32, #tpu.memory_space<vmem>>, vector<1x1x8x1xf32>
    %159 = vector.shape_cast %158 : vector<1x1x8x1xf32> to vector<8x1xf32>
    %160 = vector.broadcast %159 : vector<8x1xf32> to vector<8x256xf32>
    %161 = arith.mulf %152, %160 : vector<8x256xf32>
    %162 = arith.addf %141, %161 : vector<8x256xf32>
    %c2_118 = arith.constant 2 : index
    %c7_119 = arith.constant 7 : index
    %c0_120 = arith.constant 0 : index
    %c0_121 = arith.constant 0 : index
    %163 = vector.load %arg2[%c2_118, %c7_119, %c0_120, %c0_121] : memref<8x9x8x1xf32, #tpu.memory_space<vmem>>, vector<1x1x8x1xf32>
    %164 = vector.shape_cast %163 : vector<1x1x8x1xf32> to vector<8x1xf32>
    %165 = vector.broadcast %164 : vector<8x1xf32> to vector<8x256xf32>
    %166 = arith.mulf %152, %165 : vector<8x256xf32>
    %167 = arith.addf %146, %166 : vector<8x256xf32>
    %c3_122 = arith.constant 3 : index
    %c7_123 = arith.constant 7 : index
    %c0_124 = arith.constant 0 : index
    %c0_125 = arith.constant 0 : index
    %168 = vector.load %arg2[%c3_122, %c7_123, %c0_124, %c0_125] : memref<8x9x8x1xf32, #tpu.memory_space<vmem>>, vector<1x1x8x1xf32>
    %169 = vector.shape_cast %168 : vector<1x1x8x1xf32> to vector<8x1xf32>
    %170 = vector.broadcast %169 : vector<8x1xf32> to vector<8x256xf32>
    %171 = arith.mulf %152, %170 : vector<8x256xf32>
    %172 = arith.addf %151, %171 : vector<8x256xf32>
    %c222_i32 = arith.constant 222 : i32
    %173 = tpu.dynamic_rotate %1 by %c222_i32 dim 1 : vector<8x256xf32>, i32 -> vector<8x256xf32>
    %c0_126 = arith.constant 0 : index
    %c8 = arith.constant 8 : index
    %c0_127 = arith.constant 0 : index
    %c0_128 = arith.constant 0 : index
    %174 = vector.load %arg2[%c0_126, %c8, %c0_127, %c0_128] : memref<8x9x8x1xf32, #tpu.memory_space<vmem>>, vector<1x1x8x1xf32>
    %175 = vector.shape_cast %174 : vector<1x1x8x1xf32> to vector<8x1xf32>
    %176 = vector.broadcast %175 : vector<8x1xf32> to vector<8x256xf32>
    %177 = arith.mulf %173, %176 : vector<8x256xf32>
    %178 = arith.addf %157, %177 : vector<8x256xf32>
    %c1_129 = arith.constant 1 : index
    %c8_130 = arith.constant 8 : index
    %c0_131 = arith.constant 0 : index
    %c0_132 = arith.constant 0 : index
    %179 = vector.load %arg2[%c1_129, %c8_130, %c0_131, %c0_132] : memref<8x9x8x1xf32, #tpu.memory_space<vmem>>, vector<1x1x8x1xf32>
    %180 = vector.shape_cast %179 : vector<1x1x8x1xf32> to vector<8x1xf32>
    %181 = vector.broadcast %180 : vector<8x1xf32> to vector<8x256xf32>
    %182 = arith.mulf %173, %181 : vector<8x256xf32>
    %183 = arith.addf %162, %182 : vector<8x256xf32>
    %c2_133 = arith.constant 2 : index
    %c8_134 = arith.constant 8 : index
    %c0_135 = arith.constant 0 : index
    %c0_136 = arith.constant 0 : index
    %184 = vector.load %arg2[%c2_133, %c8_134, %c0_135, %c0_136] : memref<8x9x8x1xf32, #tpu.memory_space<vmem>>, vector<1x1x8x1xf32>
    %185 = vector.shape_cast %184 : vector<1x1x8x1xf32> to vector<8x1xf32>
    %186 = vector.broadcast %185 : vector<8x1xf32> to vector<8x256xf32>
    %187 = arith.mulf %173, %186 : vector<8x256xf32>
    %188 = arith.addf %167, %187 : vector<8x256xf32>
    %c3_137 = arith.constant 3 : index
    %c8_138 = arith.constant 8 : index
    %c0_139 = arith.constant 0 : index
    %c0_140 = arith.constant 0 : index
    %189 = vector.load %arg2[%c3_137, %c8_138, %c0_139, %c0_140] : memref<8x9x8x1xf32, #tpu.memory_space<vmem>>, vector<1x1x8x1xf32>
    %190 = vector.shape_cast %189 : vector<1x1x8x1xf32> to vector<8x1xf32>
    %191 = vector.broadcast %190 : vector<8x1xf32> to vector<8x256xf32>
    %192 = arith.mulf %173, %191 : vector<8x256xf32>
    %193 = arith.addf %172, %192 : vector<8x256xf32>
    %194 = vector.extract_strided_slice %178 {offsets = [0, 0], sizes = [4, 256], strides = [1, 1]} : vector<8x256xf32> to vector<4x256xf32>
    %cst_141 = arith.constant dense<0.000000e+00> : vector<256xf32>
    %195 = vector.multi_reduction <add>, %194, %cst_141 [0] : vector<4x256xf32> to vector<256xf32>
    %196 = vector.shape_cast %195 : vector<256xf32> to vector<1x256xf32>
    %c0_142 = arith.constant 0 : index
    %197 = memref.load %arg3[%c0_142] : memref<8xf32, #tpu.memory_space<smem>>
    %198 = vector.broadcast %197 : f32 to vector<1x256xf32>
    %199 = arith.addf %196, %198 : vector<1x256xf32>
    %200 = vector.extract_strided_slice %183 {offsets = [0, 0], sizes = [4, 256], strides = [1, 1]} : vector<8x256xf32> to vector<4x256xf32>
    %cst_143 = arith.constant dense<0.000000e+00> : vector<256xf32>
    %201 = vector.multi_reduction <add>, %200, %cst_143 [0] : vector<4x256xf32> to vector<256xf32>
    %202 = vector.shape_cast %201 : vector<256xf32> to vector<1x256xf32>
    %c1_144 = arith.constant 1 : index
    %203 = memref.load %arg3[%c1_144] : memref<8xf32, #tpu.memory_space<smem>>
    %204 = vector.broadcast %203 : f32 to vector<1x256xf32>
    %205 = arith.addf %202, %204 : vector<1x256xf32>
    %206 = vector.extract_strided_slice %188 {offsets = [0, 0], sizes = [4, 256], strides = [1, 1]} : vector<8x256xf32> to vector<4x256xf32>
    %cst_145 = arith.constant dense<0.000000e+00> : vector<256xf32>
    %207 = vector.multi_reduction <add>, %206, %cst_145 [0] : vector<4x256xf32> to vector<256xf32>
    %208 = vector.shape_cast %207 : vector<256xf32> to vector<1x256xf32>
    %c2_146 = arith.constant 2 : index
    %209 = memref.load %arg3[%c2_146] : memref<8xf32, #tpu.memory_space<smem>>
    %210 = vector.broadcast %209 : f32 to vector<1x256xf32>
    %211 = arith.addf %208, %210 : vector<1x256xf32>
    %212 = vector.extract_strided_slice %193 {offsets = [0, 0], sizes = [4, 256], strides = [1, 1]} : vector<8x256xf32> to vector<4x256xf32>
    %cst_147 = arith.constant dense<0.000000e+00> : vector<256xf32>
    %213 = vector.multi_reduction <add>, %212, %cst_147 [0] : vector<4x256xf32> to vector<256xf32>
    %214 = vector.shape_cast %213 : vector<256xf32> to vector<1x256xf32>
    %c3_148 = arith.constant 3 : index
    %215 = memref.load %arg3[%c3_148] : memref<8xf32, #tpu.memory_space<smem>>
    %216 = vector.broadcast %215 : f32 to vector<1x256xf32>
    %217 = arith.addf %214, %216 : vector<1x256xf32>
    %218 = tpu.concatenate %199, %205, %211, %217 in 0 : vector<1x256xf32>, vector<1x256xf32>, vector<1x256xf32>, vector<1x256xf32> -> vector<4x256xf32>
    %219 = vector.extract_strided_slice %178 {offsets = [4, 0], sizes = [4, 256], strides = [1, 1]} : vector<8x256xf32> to vector<4x256xf32>
    %cst_149 = arith.constant dense<0.000000e+00> : vector<256xf32>
    %220 = vector.multi_reduction <add>, %219, %cst_149 [0] : vector<4x256xf32> to vector<256xf32>
    %221 = vector.shape_cast %220 : vector<256xf32> to vector<1x256xf32>
    %c0_150 = arith.constant 0 : index
    %222 = memref.load %arg3[%c0_150] : memref<8xf32, #tpu.memory_space<smem>>
    %223 = vector.broadcast %222 : f32 to vector<1x256xf32>
    %224 = arith.addf %221, %223 : vector<1x256xf32>
    %225 = vector.extract_strided_slice %183 {offsets = [4, 0], sizes = [4, 256], strides = [1, 1]} : vector<8x256xf32> to vector<4x256xf32>
    %cst_151 = arith.constant dense<0.000000e+00> : vector<256xf32>
    %226 = vector.multi_reduction <add>, %225, %cst_151 [0] : vector<4x256xf32> to vector<256xf32>
    %227 = vector.shape_cast %226 : vector<256xf32> to vector<1x256xf32>
    %c1_152 = arith.constant 1 : index
    %228 = memref.load %arg3[%c1_152] : memref<8xf32, #tpu.memory_space<smem>>
    %229 = vector.broadcast %228 : f32 to vector<1x256xf32>
    %230 = arith.addf %227, %229 : vector<1x256xf32>
    %231 = vector.extract_strided_slice %188 {offsets = [4, 0], sizes = [4, 256], strides = [1, 1]} : vector<8x256xf32> to vector<4x256xf32>
    %cst_153 = arith.constant dense<0.000000e+00> : vector<256xf32>
    %232 = vector.multi_reduction <add>, %231, %cst_153 [0] : vector<4x256xf32> to vector<256xf32>
    %233 = vector.shape_cast %232 : vector<256xf32> to vector<1x256xf32>
    %c2_154 = arith.constant 2 : index
    %234 = memref.load %arg3[%c2_154] : memref<8xf32, #tpu.memory_space<smem>>
    %235 = vector.broadcast %234 : f32 to vector<1x256xf32>
    %236 = arith.addf %233, %235 : vector<1x256xf32>
    %237 = vector.extract_strided_slice %193 {offsets = [4, 0], sizes = [4, 256], strides = [1, 1]} : vector<8x256xf32> to vector<4x256xf32>
    %cst_155 = arith.constant dense<0.000000e+00> : vector<256xf32>
    %238 = vector.multi_reduction <add>, %237, %cst_155 [0] : vector<4x256xf32> to vector<256xf32>
    %239 = vector.shape_cast %238 : vector<256xf32> to vector<1x256xf32>
    %c3_156 = arith.constant 3 : index
    %240 = memref.load %arg3[%c3_156] : memref<8xf32, #tpu.memory_space<smem>>
    %241 = vector.broadcast %240 : f32 to vector<1x256xf32>
    %242 = arith.addf %239, %241 : vector<1x256xf32>
    %243 = tpu.concatenate %224, %230, %236, %242 in 0 : vector<1x256xf32>, vector<1x256xf32>, vector<1x256xf32>, vector<1x256xf32> -> vector<4x256xf32>
    %244 = vector.shape_cast %218 : vector<4x256xf32> to vector<1x4x256xf32>
    %245 = vector.shape_cast %243 : vector<4x256xf32> to vector<1x4x256xf32>
    %246 = tpu.concatenate %244, %245 in 0 : vector<1x4x256xf32>, vector<1x4x256xf32> -> vector<2x4x256xf32>
    %c0_157 = arith.constant 0 : index
    %c0_158 = arith.constant 0 : index
    %c0_159 = arith.constant 0 : index
    %247 = vector.load %arg4[%c0_157, %c0_158, %c0_159] : memref<2x8x256xf32, #tpu.memory_space<vmem>>, vector<2x4x256xf32>
    tpu.vector_store %arg4[%c0_157, %c0_158, %c0_159], %246 {strides = array<i32>} : memref<2x8x256xf32, #tpu.memory_space<vmem>>, vector<2x4x256xf32>,
    %c1_160 = arith.constant 1 : index
    %c0_161 = arith.constant 0 : index
    %c0_162 = arith.constant 0 : index
    %248 = vector.load %arg1[%c1_160, %c0_161, %c0_162] : memref<2x8x256xf32, #tpu.memory_space<vmem>>, vector<1x8x256xf32>
    %249 = vector.shape_cast %248 : vector<1x8x256xf32> to vector<8x256xf32>
    %cst_163 = arith.constant 0.000000e+00 : f32
    %250 = vector.broadcast %cst_163 : f32 to vector<8x256xf32>
    %cst_164 = arith.constant 0.000000e+00 : f32
    %251 = vector.broadcast %cst_164 : f32 to vector<8x256xf32>
    %cst_165 = arith.constant 0.000000e+00 : f32
    %252 = vector.broadcast %cst_165 : f32 to vector<8x256xf32>
    %cst_166 = arith.constant 0.000000e+00 : f32
    %253 = vector.broadcast %cst_166 : f32 to vector<8x256xf32>
    %c4_167 = arith.constant 4 : index
    %c0_168 = arith.constant 0 : index
    %c0_169 = arith.constant 0 : index
    %c0_170 = arith.constant 0 : index
    %254 = vector.load %arg2[%c4_167, %c0_168, %c0_169, %c0_170] : memref<8x9x8x1xf32, #tpu.memory_space<vmem>>, vector<1x1x8x1xf32>
    %255 = vector.shape_cast %254 : vector<1x1x8x1xf32> to vector<8x1xf32>
    %256 = vector.broadcast %255 : vector<8x1xf32> to vector<8x256xf32>
    %257 = arith.mulf %249, %256 : vector<8x256xf32>
    %258 = arith.addf %250, %257 : vector<8x256xf32>
    %c5_171 = arith.constant 5 : index
    %c0_172 = arith.constant 0 : index
    %c0_173 = arith.constant 0 : index
    %c0_174 = arith.constant 0 : index
    %259 = vector.load %arg2[%c5_171, %c0_172, %c0_173, %c0_174] : memref<8x9x8x1xf32, #tpu.memory_space<vmem>>, vector<1x1x8x1xf32>
    %260 = vector.shape_cast %259 : vector<1x1x8x1xf32> to vector<8x1xf32>
    %261 = vector.broadcast %260 : vector<8x1xf32> to vector<8x256xf32>
    %262 = arith.mulf %249, %261 : vector<8x256xf32>
    %263 = arith.addf %251, %262 : vector<8x256xf32>
    %c6_175 = arith.constant 6 : index
    %c0_176 = arith.constant 0 : index
    %c0_177 = arith.constant 0 : index
    %c0_178 = arith.constant 0 : index
    %264 = vector.load %arg2[%c6_175, %c0_176, %c0_177, %c0_178] : memref<8x9x8x1xf32, #tpu.memory_space<vmem>>, vector<1x1x8x1xf32>
    %265 = vector.shape_cast %264 : vector<1x1x8x1xf32> to vector<8x1xf32>
    %266 = vector.broadcast %265 : vector<8x1xf32> to vector<8x256xf32>
    %267 = arith.mulf %249, %266 : vector<8x256xf32>
    %268 = arith.addf %252, %267 : vector<8x256xf32>
    %c7_179 = arith.constant 7 : index
    %c0_180 = arith.constant 0 : index
    %c0_181 = arith.constant 0 : index
    %c0_182 = arith.constant 0 : index
    %269 = vector.load %arg2[%c7_179, %c0_180, %c0_181, %c0_182] : memref<8x9x8x1xf32, #tpu.memory_space<vmem>>, vector<1x1x8x1xf32>
    %270 = vector.shape_cast %269 : vector<1x1x8x1xf32> to vector<8x1xf32>
    %271 = vector.broadcast %270 : vector<8x1xf32> to vector<8x256xf32>
    %272 = arith.mulf %249, %271 : vector<8x256xf32>
    %273 = arith.addf %253, %272 : vector<8x256xf32>
    %c255_i32_183 = arith.constant 255 : i32
    %274 = tpu.dynamic_rotate %249 by %c255_i32_183 dim 1 : vector<8x256xf32>, i32 -> vector<8x256xf32>
    %c4_184 = arith.constant 4 : index
    %c1_185 = arith.constant 1 : index
    %c0_186 = arith.constant 0 : index
    %c0_187 = arith.constant 0 : index
    %275 = vector.load %arg2[%c4_184, %c1_185, %c0_186, %c0_187] : memref<8x9x8x1xf32, #tpu.memory_space<vmem>>, vector<1x1x8x1xf32>
    %276 = vector.shape_cast %275 : vector<1x1x8x1xf32> to vector<8x1xf32>
    %277 = vector.broadcast %276 : vector<8x1xf32> to vector<8x256xf32>
    %278 = arith.mulf %274, %277 : vector<8x256xf32>
    %279 = arith.addf %258, %278 : vector<8x256xf32>
    %c5_188 = arith.constant 5 : index
    %c1_189 = arith.constant 1 : index
    %c0_190 = arith.constant 0 : index
    %c0_191 = arith.constant 0 : index
    %280 = vector.load %arg2[%c5_188, %c1_189, %c0_190, %c0_191] : memref<8x9x8x1xf32, #tpu.memory_space<vmem>>, vector<1x1x8x1xf32>
    %281 = vector.shape_cast %280 : vector<1x1x8x1xf32> to vector<8x1xf32>
    %282 = vector.broadcast %281 : vector<8x1xf32> to vector<8x256xf32>
    %283 = arith.mulf %274, %282 : vector<8x256xf32>
    %284 = arith.addf %263, %283 : vector<8x256xf32>
    %c6_192 = arith.constant 6 : index
    %c1_193 = arith.constant 1 : index
    %c0_194 = arith.constant 0 : index
    %c0_195 = arith.constant 0 : index
    %285 = vector.load %arg2[%c6_192, %c1_193, %c0_194, %c0_195] : memref<8x9x8x1xf32, #tpu.memory_space<vmem>>, vector<1x1x8x1xf32>
    %286 = vector.shape_cast %285 : vector<1x1x8x1xf32> to vector<8x1xf32>
    %287 = vector.broadcast %286 : vector<8x1xf32> to vector<8x256xf32>
    %288 = arith.mulf %274, %287 : vector<8x256xf32>
    %289 = arith.addf %268, %288 : vector<8x256xf32>
    %c7_196 = arith.constant 7 : index
    %c1_197 = arith.constant 1 : index
    %c0_198 = arith.constant 0 : index
    %c0_199 = arith.constant 0 : index
    %290 = vector.load %arg2[%c7_196, %c1_197, %c0_198, %c0_199] : memref<8x9x8x1xf32, #tpu.memory_space<vmem>>, vector<1x1x8x1xf32>
    %291 = vector.shape_cast %290 : vector<1x1x8x1xf32> to vector<8x1xf32>
    %292 = vector.broadcast %291 : vector<8x1xf32> to vector<8x256xf32>
    %293 = arith.mulf %274, %292 : vector<8x256xf32>
    %294 = arith.addf %273, %293 : vector<8x256xf32>
    %c254_i32_200 = arith.constant 254 : i32
    %295 = tpu.dynamic_rotate %249 by %c254_i32_200 dim 1 : vector<8x256xf32>, i32 -> vector<8x256xf32>
    %c4_201 = arith.constant 4 : index
    %c2_202 = arith.constant 2 : index
    %c0_203 = arith.constant 0 : index
    %c0_204 = arith.constant 0 : index
    %296 = vector.load %arg2[%c4_201, %c2_202, %c0_203, %c0_204] : memref<8x9x8x1xf32, #tpu.memory_space<vmem>>, vector<1x1x8x1xf32>
    %297 = vector.shape_cast %296 : vector<1x1x8x1xf32> to vector<8x1xf32>
    %298 = vector.broadcast %297 : vector<8x1xf32> to vector<8x256xf32>
    %299 = arith.mulf %295, %298 : vector<8x256xf32>
    %300 = arith.addf %279, %299 : vector<8x256xf32>
    %c5_205 = arith.constant 5 : index
    %c2_206 = arith.constant 2 : index
    %c0_207 = arith.constant 0 : index
    %c0_208 = arith.constant 0 : index
    %301 = vector.load %arg2[%c5_205, %c2_206, %c0_207, %c0_208] : memref<8x9x8x1xf32, #tpu.memory_space<vmem>>, vector<1x1x8x1xf32>
    %302 = vector.shape_cast %301 : vector<1x1x8x1xf32> to vector<8x1xf32>
    %303 = vector.broadcast %302 : vector<8x1xf32> to vector<8x256xf32>
    %304 = arith.mulf %295, %303 : vector<8x256xf32>
    %305 = arith.addf %284, %304 : vector<8x256xf32>
    %c6_209 = arith.constant 6 : index
    %c2_210 = arith.constant 2 : index
    %c0_211 = arith.constant 0 : index
    %c0_212 = arith.constant 0 : index
    %306 = vector.load %arg2[%c6_209, %c2_210, %c0_211, %c0_212] : memref<8x9x8x1xf32, #tpu.memory_space<vmem>>, vector<1x1x8x1xf32>
    %307 = vector.shape_cast %306 : vector<1x1x8x1xf32> to vector<8x1xf32>
    %308 = vector.broadcast %307 : vector<8x1xf32> to vector<8x256xf32>
    %309 = arith.mulf %295, %308 : vector<8x256xf32>
    %310 = arith.addf %289, %309 : vector<8x256xf32>
    %c7_213 = arith.constant 7 : index
    %c2_214 = arith.constant 2 : index
    %c0_215 = arith.constant 0 : index
    %c0_216 = arith.constant 0 : index
    %311 = vector.load %arg2[%c7_213, %c2_214, %c0_215, %c0_216] : memref<8x9x8x1xf32, #tpu.memory_space<vmem>>, vector<1x1x8x1xf32>
    %312 = vector.shape_cast %311 : vector<1x1x8x1xf32> to vector<8x1xf32>
    %313 = vector.broadcast %312 : vector<8x1xf32> to vector<8x256xf32>
    %314 = arith.mulf %295, %313 : vector<8x256xf32>
    %315 = arith.addf %294, %314 : vector<8x256xf32>
    %c240_i32_217 = arith.constant 240 : i32
    %316 = tpu.dynamic_rotate %249 by %c240_i32_217 dim 1 : vector<8x256xf32>, i32 -> vector<8x256xf32>
    %c4_218 = arith.constant 4 : index
    %c3_219 = arith.constant 3 : index
    %c0_220 = arith.constant 0 : index
    %c0_221 = arith.constant 0 : index
    %317 = vector.load %arg2[%c4_218, %c3_219, %c0_220, %c0_221] : memref<8x9x8x1xf32, #tpu.memory_space<vmem>>, vector<1x1x8x1xf32>
    %318 = vector.shape_cast %317 : vector<1x1x8x1xf32> to vector<8x1xf32>
    %319 = vector.broadcast %318 : vector<8x1xf32> to vector<8x256xf32>
    %320 = arith.mulf %316, %319 : vector<8x256xf32>
    %321 = arith.addf %300, %320 : vector<8x256xf32>
    %c5_222 = arith.constant 5 : index
    %c3_223 = arith.constant 3 : index
    %c0_224 = arith.constant 0 : index
    %c0_225 = arith.constant 0 : index
    %322 = vector.load %arg2[%c5_222, %c3_223, %c0_224, %c0_225] : memref<8x9x8x1xf32, #tpu.memory_space<vmem>>, vector<1x1x8x1xf32>
    %323 = vector.shape_cast %322 : vector<1x1x8x1xf32> to vector<8x1xf32>
    %324 = vector.broadcast %323 : vector<8x1xf32> to vector<8x256xf32>
    %325 = arith.mulf %316, %324 : vector<8x256xf32>
    %326 = arith.addf %305, %325 : vector<8x256xf32>
    %c6_226 = arith.constant 6 : index
    %c3_227 = arith.constant 3 : index
    %c0_228 = arith.constant 0 : index
    %c0_229 = arith.constant 0 : index
    %327 = vector.load %arg2[%c6_226, %c3_227, %c0_228, %c0_229] : memref<8x9x8x1xf32, #tpu.memory_space<vmem>>, vector<1x1x8x1xf32>
    %328 = vector.shape_cast %327 : vector<1x1x8x1xf32> to vector<8x1xf32>
    %329 = vector.broadcast %328 : vector<8x1xf32> to vector<8x256xf32>
    %330 = arith.mulf %316, %329 : vector<8x256xf32>
    %331 = arith.addf %310, %330 : vector<8x256xf32>
    %c7_230 = arith.constant 7 : index
    %c3_231 = arith.constant 3 : index
    %c0_232 = arith.constant 0 : index
    %c0_233 = arith.constant 0 : index
    %332 = vector.load %arg2[%c7_230, %c3_231, %c0_232, %c0_233] : memref<8x9x8x1xf32, #tpu.memory_space<vmem>>, vector<1x1x8x1xf32>
    %333 = vector.shape_cast %332 : vector<1x1x8x1xf32> to vector<8x1xf32>
    %334 = vector.broadcast %333 : vector<8x1xf32> to vector<8x256xf32>
    %335 = arith.mulf %316, %334 : vector<8x256xf32>
    %336 = arith.addf %315, %335 : vector<8x256xf32>
    %c239_i32_234 = arith.constant 239 : i32
    %337 = tpu.dynamic_rotate %249 by %c239_i32_234 dim 1 : vector<8x256xf32>, i32 -> vector<8x256xf32>
    %c4_235 = arith.constant 4 : index
    %c4_236 = arith.constant 4 : index
    %c0_237 = arith.constant 0 : index
    %c0_238 = arith.constant 0 : index
    %338 = vector.load %arg2[%c4_235, %c4_236, %c0_237, %c0_238] : memref<8x9x8x1xf32, #tpu.memory_space<vmem>>, vector<1x1x8x1xf32>
    %339 = vector.shape_cast %338 : vector<1x1x8x1xf32> to vector<8x1xf32>
    %340 = vector.broadcast %339 : vector<8x1xf32> to vector<8x256xf32>
    %341 = arith.mulf %337, %340 : vector<8x256xf32>
    %342 = arith.addf %321, %341 : vector<8x256xf32>
    %c5_239 = arith.constant 5 : index
    %c4_240 = arith.constant 4 : index
    %c0_241 = arith.constant 0 : index
    %c0_242 = arith.constant 0 : index
    %343 = vector.load %arg2[%c5_239, %c4_240, %c0_241, %c0_242] : memref<8x9x8x1xf32, #tpu.memory_space<vmem>>, vector<1x1x8x1xf32>
    %344 = vector.shape_cast %343 : vector<1x1x8x1xf32> to vector<8x1xf32>
    %345 = vector.broadcast %344 : vector<8x1xf32> to vector<8x256xf32>
    %346 = arith.mulf %337, %345 : vector<8x256xf32>
    %347 = arith.addf %326, %346 : vector<8x256xf32>
    %c6_243 = arith.constant 6 : index
    %c4_244 = arith.constant 4 : index
    %c0_245 = arith.constant 0 : index
    %c0_246 = arith.constant 0 : index
    %348 = vector.load %arg2[%c6_243, %c4_244, %c0_245, %c0_246] : memref<8x9x8x1xf32, #tpu.memory_space<vmem>>, vector<1x1x8x1xf32>
    %349 = vector.shape_cast %348 : vector<1x1x8x1xf32> to vector<8x1xf32>
    %350 = vector.broadcast %349 : vector<8x1xf32> to vector<8x256xf32>
    %351 = arith.mulf %337, %350 : vector<8x256xf32>
    %352 = arith.addf %331, %351 : vector<8x256xf32>
    %c7_247 = arith.constant 7 : index
    %c4_248 = arith.constant 4 : index
    %c0_249 = arith.constant 0 : index
    %c0_250 = arith.constant 0 : index
    %353 = vector.load %arg2[%c7_247, %c4_248, %c0_249, %c0_250] : memref<8x9x8x1xf32, #tpu.memory_space<vmem>>, vector<1x1x8x1xf32>
    %354 = vector.shape_cast %353 : vector<1x1x8x1xf32> to vector<8x1xf32>
    %355 = vector.broadcast %354 : vector<8x1xf32> to vector<8x256xf32>
    %356 = arith.mulf %337, %355 : vector<8x256xf32>
    %357 = arith.addf %336, %356 : vector<8x256xf32>
    %c238_i32_251 = arith.constant 238 : i32
    %358 = tpu.dynamic_rotate %249 by %c238_i32_251 dim 1 : vector<8x256xf32>, i32 -> vector<8x256xf32>
    %c4_252 = arith.constant 4 : index
    %c5_253 = arith.constant 5 : index
    %c0_254 = arith.constant 0 : index
    %c0_255 = arith.constant 0 : index
    %359 = vector.load %arg2[%c4_252, %c5_253, %c0_254, %c0_255] : memref<8x9x8x1xf32, #tpu.memory_space<vmem>>, vector<1x1x8x1xf32>
    %360 = vector.shape_cast %359 : vector<1x1x8x1xf32> to vector<8x1xf32>
    %361 = vector.broadcast %360 : vector<8x1xf32> to vector<8x256xf32>
    %362 = arith.mulf %358, %361 : vector<8x256xf32>
    %363 = arith.addf %342, %362 : vector<8x256xf32>
    %c5_256 = arith.constant 5 : index
    %c5_257 = arith.constant 5 : index
    %c0_258 = arith.constant 0 : index
    %c0_259 = arith.constant 0 : index
    %364 = vector.load %arg2[%c5_256, %c5_257, %c0_258, %c0_259] : memref<8x9x8x1xf32, #tpu.memory_space<vmem>>, vector<1x1x8x1xf32>
    %365 = vector.shape_cast %364 : vector<1x1x8x1xf32> to vector<8x1xf32>
    %366 = vector.broadcast %365 : vector<8x1xf32> to vector<8x256xf32>
    %367 = arith.mulf %358, %366 : vector<8x256xf32>
    %368 = arith.addf %347, %367 : vector<8x256xf32>
    %c6_260 = arith.constant 6 : index
    %c5_261 = arith.constant 5 : index
    %c0_262 = arith.constant 0 : index
    %c0_263 = arith.constant 0 : index
    %369 = vector.load %arg2[%c6_260, %c5_261, %c0_262, %c0_263] : memref<8x9x8x1xf32, #tpu.memory_space<vmem>>, vector<1x1x8x1xf32>
    %370 = vector.shape_cast %369 : vector<1x1x8x1xf32> to vector<8x1xf32>
    %371 = vector.broadcast %370 : vector<8x1xf32> to vector<8x256xf32>
    %372 = arith.mulf %358, %371 : vector<8x256xf32>
    %373 = arith.addf %352, %372 : vector<8x256xf32>
    %c7_264 = arith.constant 7 : index
    %c5_265 = arith.constant 5 : index
    %c0_266 = arith.constant 0 : index
    %c0_267 = arith.constant 0 : index
    %374 = vector.load %arg2[%c7_264, %c5_265, %c0_266, %c0_267] : memref<8x9x8x1xf32, #tpu.memory_space<vmem>>, vector<1x1x8x1xf32>
    %375 = vector.shape_cast %374 : vector<1x1x8x1xf32> to vector<8x1xf32>
    %376 = vector.broadcast %375 : vector<8x1xf32> to vector<8x256xf32>
    %377 = arith.mulf %358, %376 : vector<8x256xf32>
    %378 = arith.addf %357, %377 : vector<8x256xf32>
    %c224_i32_268 = arith.constant 224 : i32
    %379 = tpu.dynamic_rotate %249 by %c224_i32_268 dim 1 : vector<8x256xf32>, i32 -> vector<8x256xf32>
    %c4_269 = arith.constant 4 : index
    %c6_270 = arith.constant 6 : index
    %c0_271 = arith.constant 0 : index
    %c0_272 = arith.constant 0 : index
    %380 = vector.load %arg2[%c4_269, %c6_270, %c0_271, %c0_272] : memref<8x9x8x1xf32, #tpu.memory_space<vmem>>, vector<1x1x8x1xf32>
    %381 = vector.shape_cast %380 : vector<1x1x8x1xf32> to vector<8x1xf32>
    %382 = vector.broadcast %381 : vector<8x1xf32> to vector<8x256xf32>
    %383 = arith.mulf %379, %382 : vector<8x256xf32>
    %384 = arith.addf %363, %383 : vector<8x256xf32>
    %c5_273 = arith.constant 5 : index
    %c6_274 = arith.constant 6 : index
    %c0_275 = arith.constant 0 : index
    %c0_276 = arith.constant 0 : index
    %385 = vector.load %arg2[%c5_273, %c6_274, %c0_275, %c0_276] : memref<8x9x8x1xf32, #tpu.memory_space<vmem>>, vector<1x1x8x1xf32>
    %386 = vector.shape_cast %385 : vector<1x1x8x1xf32> to vector<8x1xf32>
    %387 = vector.broadcast %386 : vector<8x1xf32> to vector<8x256xf32>
    %388 = arith.mulf %379, %387 : vector<8x256xf32>
    %389 = arith.addf %368, %388 : vector<8x256xf32>
    %c6_277 = arith.constant 6 : index
    %c6_278 = arith.constant 6 : index
    %c0_279 = arith.constant 0 : index
    %c0_280 = arith.constant 0 : index
    %390 = vector.load %arg2[%c6_277, %c6_278, %c0_279, %c0_280] : memref<8x9x8x1xf32, #tpu.memory_space<vmem>>, vector<1x1x8x1xf32>
    %391 = vector.shape_cast %390 : vector<1x1x8x1xf32> to vector<8x1xf32>
    %392 = vector.broadcast %391 : vector<8x1xf32> to vector<8x256xf32>
    %393 = arith.mulf %379, %392 : vector<8x256xf32>
    %394 = arith.addf %373, %393 : vector<8x256xf32>
    %c7_281 = arith.constant 7 : index
    %c6_282 = arith.constant 6 : index
    %c0_283 = arith.constant 0 : index
    %c0_284 = arith.constant 0 : index
    %395 = vector.load %arg2[%c7_281, %c6_282, %c0_283, %c0_284] : memref<8x9x8x1xf32, #tpu.memory_space<vmem>>, vector<1x1x8x1xf32>
    %396 = vector.shape_cast %395 : vector<1x1x8x1xf32> to vector<8x1xf32>
    %397 = vector.broadcast %396 : vector<8x1xf32> to vector<8x256xf32>
    %398 = arith.mulf %379, %397 : vector<8x256xf32>
    %399 = arith.addf %378, %398 : vector<8x256xf32>
    %c223_i32_285 = arith.constant 223 : i32
    %400 = tpu.dynamic_rotate %249 by %c223_i32_285 dim 1 : vector<8x256xf32>, i32 -> vector<8x256xf32>
    %c4_286 = arith.constant 4 : index
    %c7_287 = arith.constant 7 : index
    %c0_288 = arith.constant 0 : index
    %c0_289 = arith.constant 0 : index
    %401 = vector.load %arg2[%c4_286, %c7_287, %c0_288, %c0_289] : memref<8x9x8x1xf32, #tpu.memory_space<vmem>>, vector<1x1x8x1xf32>
    %402 = vector.shape_cast %401 : vector<1x1x8x1xf32> to vector<8x1xf32>
    %403 = vector.broadcast %402 : vector<8x1xf32> to vector<8x256xf32>
    %404 = arith.mulf %400, %403 : vector<8x256xf32>
    %405 = arith.addf %384, %404 : vector<8x256xf32>
    %c5_290 = arith.constant 5 : index
    %c7_291 = arith.constant 7 : index
    %c0_292 = arith.constant 0 : index
    %c0_293 = arith.constant 0 : index
    %406 = vector.load %arg2[%c5_290, %c7_291, %c0_292, %c0_293] : memref<8x9x8x1xf32, #tpu.memory_space<vmem>>, vector<1x1x8x1xf32>
    %407 = vector.shape_cast %406 : vector<1x1x8x1xf32> to vector<8x1xf32>
    %408 = vector.broadcast %407 : vector<8x1xf32> to vector<8x256xf32>
    %409 = arith.mulf %400, %408 : vector<8x256xf32>
    %410 = arith.addf %389, %409 : vector<8x256xf32>
    %c6_294 = arith.constant 6 : index
    %c7_295 = arith.constant 7 : index
    %c0_296 = arith.constant 0 : index
    %c0_297 = arith.constant 0 : index
    %411 = vector.load %arg2[%c6_294, %c7_295, %c0_296, %c0_297] : memref<8x9x8x1xf32, #tpu.memory_space<vmem>>, vector<1x1x8x1xf32>
    %412 = vector.shape_cast %411 : vector<1x1x8x1xf32> to vector<8x1xf32>
    %413 = vector.broadcast %412 : vector<8x1xf32> to vector<8x256xf32>
    %414 = arith.mulf %400, %413 : vector<8x256xf32>
    %415 = arith.addf %394, %414 : vector<8x256xf32>
    %c7_298 = arith.constant 7 : index
    %c7_299 = arith.constant 7 : index
    %c0_300 = arith.constant 0 : index
    %c0_301 = arith.constant 0 : index
    %416 = vector.load %arg2[%c7_298, %c7_299, %c0_300, %c0_301] : memref<8x9x8x1xf32, #tpu.memory_space<vmem>>, vector<1x1x8x1xf32>
    %417 = vector.shape_cast %416 : vector<1x1x8x1xf32> to vector<8x1xf32>
    %418 = vector.broadcast %417 : vector<8x1xf32> to vector<8x256xf32>
    %419 = arith.mulf %400, %418 : vector<8x256xf32>
    %420 = arith.addf %399, %419 : vector<8x256xf32>
    %c222_i32_302 = arith.constant 222 : i32
    %421 = tpu.dynamic_rotate %249 by %c222_i32_302 dim 1 : vector<8x256xf32>, i32 -> vector<8x256xf32>
    %c4_303 = arith.constant 4 : index
    %c8_304 = arith.constant 8 : index
    %c0_305 = arith.constant 0 : index
    %c0_306 = arith.constant 0 : index
    %422 = vector.load %arg2[%c4_303, %c8_304, %c0_305, %c0_306] : memref<8x9x8x1xf32, #tpu.memory_space<vmem>>, vector<1x1x8x1xf32>
    %423 = vector.shape_cast %422 : vector<1x1x8x1xf32> to vector<8x1xf32>
    %424 = vector.broadcast %423 : vector<8x1xf32> to vector<8x256xf32>
    %425 = arith.mulf %421, %424 : vector<8x256xf32>
    %426 = arith.addf %405, %425 : vector<8x256xf32>
    %c5_307 = arith.constant 5 : index
    %c8_308 = arith.constant 8 : index
    %c0_309 = arith.constant 0 : index
    %c0_310 = arith.constant 0 : index
    %427 = vector.load %arg2[%c5_307, %c8_308, %c0_309, %c0_310] : memref<8x9x8x1xf32, #tpu.memory_space<vmem>>, vector<1x1x8x1xf32>
    %428 = vector.shape_cast %427 : vector<1x1x8x1xf32> to vector<8x1xf32>
    %429 = vector.broadcast %428 : vector<8x1xf32> to vector<8x256xf32>
    %430 = arith.mulf %421, %429 : vector<8x256xf32>
    %431 = arith.addf %410, %430 : vector<8x256xf32>
    %c6_311 = arith.constant 6 : index
    %c8_312 = arith.constant 8 : index
    %c0_313 = arith.constant 0 : index
    %c0_314 = arith.constant 0 : index
    %432 = vector.load %arg2[%c6_311, %c8_312, %c0_313, %c0_314] : memref<8x9x8x1xf32, #tpu.memory_space<vmem>>, vector<1x1x8x1xf32>
    %433 = vector.shape_cast %432 : vector<1x1x8x1xf32> to vector<8x1xf32>
    %434 = vector.broadcast %433 : vector<8x1xf32> to vector<8x256xf32>
    %435 = arith.mulf %421, %434 : vector<8x256xf32>
    %436 = arith.addf %415, %435 : vector<8x256xf32>
    %c7_315 = arith.constant 7 : index
    %c8_316 = arith.constant 8 : index
    %c0_317 = arith.constant 0 : index
    %c0_318 = arith.constant 0 : index
    %437 = vector.load %arg2[%c7_315, %c8_316, %c0_317, %c0_318] : memref<8x9x8x1xf32, #tpu.memory_space<vmem>>, vector<1x1x8x1xf32>
    %438 = vector.shape_cast %437 : vector<1x1x8x1xf32> to vector<8x1xf32>
    %439 = vector.broadcast %438 : vector<8x1xf32> to vector<8x256xf32>
    %440 = arith.mulf %421, %439 : vector<8x256xf32>
    %441 = arith.addf %420, %440 : vector<8x256xf32>
    %442 = vector.extract_strided_slice %426 {offsets = [0, 0], sizes = [4, 256], strides = [1, 1]} : vector<8x256xf32> to vector<4x256xf32>
    %cst_319 = arith.constant dense<0.000000e+00> : vector<256xf32>
    %443 = vector.multi_reduction <add>, %442, %cst_319 [0] : vector<4x256xf32> to vector<256xf32>
    %444 = vector.shape_cast %443 : vector<256xf32> to vector<1x256xf32>
    %c4_320 = arith.constant 4 : index
    %445 = memref.load %arg3[%c4_320] : memref<8xf32, #tpu.memory_space<smem>>
    %446 = vector.broadcast %445 : f32 to vector<1x256xf32>
    %447 = arith.addf %444, %446 : vector<1x256xf32>
    %448 = vector.extract_strided_slice %431 {offsets = [0, 0], sizes = [4, 256], strides = [1, 1]} : vector<8x256xf32> to vector<4x256xf32>
    %cst_321 = arith.constant dense<0.000000e+00> : vector<256xf32>
    %449 = vector.multi_reduction <add>, %448, %cst_321 [0] : vector<4x256xf32> to vector<256xf32>
    %450 = vector.shape_cast %449 : vector<256xf32> to vector<1x256xf32>
    %c5_322 = arith.constant 5 : index
    %451 = memref.load %arg3[%c5_322] : memref<8xf32, #tpu.memory_space<smem>>
    %452 = vector.broadcast %451 : f32 to vector<1x256xf32>
    %453 = arith.addf %450, %452 : vector<1x256xf32>
    %454 = vector.extract_strided_slice %436 {offsets = [0, 0], sizes = [4, 256], strides = [1, 1]} : vector<8x256xf32> to vector<4x256xf32>
    %cst_323 = arith.constant dense<0.000000e+00> : vector<256xf32>
    %455 = vector.multi_reduction <add>, %454, %cst_323 [0] : vector<4x256xf32> to vector<256xf32>
    %456 = vector.shape_cast %455 : vector<256xf32> to vector<1x256xf32>
    %c6_324 = arith.constant 6 : index
    %457 = memref.load %arg3[%c6_324] : memref<8xf32, #tpu.memory_space<smem>>
    %458 = vector.broadcast %457 : f32 to vector<1x256xf32>
    %459 = arith.addf %456, %458 : vector<1x256xf32>
    %460 = vector.extract_strided_slice %441 {offsets = [0, 0], sizes = [4, 256], strides = [1, 1]} : vector<8x256xf32> to vector<4x256xf32>
    %cst_325 = arith.constant dense<0.000000e+00> : vector<256xf32>
    %461 = vector.multi_reduction <add>, %460, %cst_325 [0] : vector<4x256xf32> to vector<256xf32>
    %462 = vector.shape_cast %461 : vector<256xf32> to vector<1x256xf32>
    %c7_326 = arith.constant 7 : index
    %463 = memref.load %arg3[%c7_326] : memref<8xf32, #tpu.memory_space<smem>>
    %464 = vector.broadcast %463 : f32 to vector<1x256xf32>
    %465 = arith.addf %462, %464 : vector<1x256xf32>
    %466 = tpu.concatenate %447, %453, %459, %465 in 0 : vector<1x256xf32>, vector<1x256xf32>, vector<1x256xf32>, vector<1x256xf32> -> vector<4x256xf32>
    %467 = vector.extract_strided_slice %426 {offsets = [4, 0], sizes = [4, 256], strides = [1, 1]} : vector<8x256xf32> to vector<4x256xf32>
    %cst_327 = arith.constant dense<0.000000e+00> : vector<256xf32>
    %468 = vector.multi_reduction <add>, %467, %cst_327 [0] : vector<4x256xf32> to vector<256xf32>
    %469 = vector.shape_cast %468 : vector<256xf32> to vector<1x256xf32>
    %c4_328 = arith.constant 4 : index
    %470 = memref.load %arg3[%c4_328] : memref<8xf32, #tpu.memory_space<smem>>
    %471 = vector.broadcast %470 : f32 to vector<1x256xf32>
    %472 = arith.addf %469, %471 : vector<1x256xf32>
    %473 = vector.extract_strided_slice %431 {offsets = [4, 0], sizes = [4, 256], strides = [1, 1]} : vector<8x256xf32> to vector<4x256xf32>
    %cst_329 = arith.constant dense<0.000000e+00> : vector<256xf32>
    %474 = vector.multi_reduction <add>, %473, %cst_329 [0] : vector<4x256xf32> to vector<256xf32>
    %475 = vector.shape_cast %474 : vector<256xf32> to vector<1x256xf32>
    %c5_330 = arith.constant 5 : index
    %476 = memref.load %arg3[%c5_330] : memref<8xf32, #tpu.memory_space<smem>>
    %477 = vector.broadcast %476 : f32 to vector<1x256xf32>
    %478 = arith.addf %475, %477 : vector<1x256xf32>
    %479 = vector.extract_strided_slice %436 {offsets = [4, 0], sizes = [4, 256], strides = [1, 1]} : vector<8x256xf32> to vector<4x256xf32>
    %cst_331 = arith.constant dense<0.000000e+00> : vector<256xf32>
    %480 = vector.multi_reduction <add>, %479, %cst_331 [0] : vector<4x256xf32> to vector<256xf32>
    %481 = vector.shape_cast %480 : vector<256xf32> to vector<1x256xf32>
    %c6_332 = arith.constant 6 : index
    %482 = memref.load %arg3[%c6_332] : memref<8xf32, #tpu.memory_space<smem>>
    %483 = vector.broadcast %482 : f32 to vector<1x256xf32>
    %484 = arith.addf %481, %483 : vector<1x256xf32>
    %485 = vector.extract_strided_slice %441 {offsets = [4, 0], sizes = [4, 256], strides = [1, 1]} : vector<8x256xf32> to vector<4x256xf32>
    %cst_333 = arith.constant dense<0.000000e+00> : vector<256xf32>
    %486 = vector.multi_reduction <add>, %485, %cst_333 [0] : vector<4x256xf32> to vector<256xf32>
    %487 = vector.shape_cast %486 : vector<256xf32> to vector<1x256xf32>
    %c7_334 = arith.constant 7 : index
    %488 = memref.load %arg3[%c7_334] : memref<8xf32, #tpu.memory_space<smem>>
    %489 = vector.broadcast %488 : f32 to vector<1x256xf32>
    %490 = arith.addf %487, %489 : vector<1x256xf32>
    %491 = tpu.concatenate %472, %478, %484, %490 in 0 : vector<1x256xf32>, vector<1x256xf32>, vector<1x256xf32>, vector<1x256xf32> -> vector<4x256xf32>
    %492 = vector.shape_cast %466 : vector<4x256xf32> to vector<1x4x256xf32>
    %493 = vector.shape_cast %491 : vector<4x256xf32> to vector<1x4x256xf32>
    %494 = tpu.concatenate %492, %493 in 0 : vector<1x4x256xf32>, vector<1x4x256xf32> -> vector<2x4x256xf32>
    %c0_335 = arith.constant 0 : index
    %c4_336 = arith.constant 4 : index
    %c0_337 = arith.constant 0 : index
    %495 = vector.load %arg4[%c0_335, %c4_336, %c0_337] : memref<2x8x256xf32, #tpu.memory_space<vmem>>, vector<2x4x256xf32>
    tpu.vector_store %arg4[%c0_335, %c4_336, %c0_337], %494 {strides = array<i32>} : memref<2x8x256xf32, #tpu.memory_space<vmem>>, vector<2x4x256xf32>,
    return
  }
  func.func @transform_0(%arg0: i32) -> (i32, i32, i32) {
    %c0_i32 = arith.constant 0 : i32
    %c0_i32_0 = arith.constant 0 : i32
    %c0_i32_1 = arith.constant 0 : i32
    return %c0_i32, %arg0, %c0_i32_0 : i32, i32, i32
  }
  func.func @transform_1(%arg0: i32) -> (i32, i32, i32, i32) {
    %c0_i32 = arith.constant 0 : i32
    %c0_i32_0 = arith.constant 0 : i32
    %c0_i32_1 = arith.constant 0 : i32
    %c0_i32_2 = arith.constant 0 : i32
    %c0_i32_3 = arith.constant 0 : i32
    return %c0_i32, %c0_i32_0, %c0_i32_1, %c0_i32_2 : i32, i32, i32, i32
  }
  func.func @transform_2(%arg0: i32) -> i32 {
    %c0_i32 = arith.constant 0 : i32
    %c0_i32_0 = arith.constant 0 : i32
    return %c0_i32 : i32
  }
  func.func @transform_3(%arg0: i32) -> (i32, i32, i32) {
    %c0_i32 = arith.constant 0 : i32
    %c0_i32_0 = arith.constant 0 : i32
    %c0_i32_1 = arith.constant 0 : i32
    return %arg0, %c0_i32, %c0_i32_0 : i32, i32, i32
  }
}

</mosaic_0001>

<llo_original>
// kernel: tpu_custom_call.1
$region0: #{tpu_custom_call.1}
  #allocation0 [shape = 'u32[]', space=smem, size = 0x4, offset = 0x4, fixed_abs, tag = 'smem constant byte address 0x4 - core index']
  #allocation1 [shape = 'u32[144,128]{1,0:T(1,128)}', space=vmem, size = 0x12000, scoped, tag = 'internal scratch']
  %s0 = inlined_call_operand.vmem [shape: f32[2,8,256], index: 0, kind: input, shape index: {}]
  %s1 = inlined_call_operand.vmem [shape: f32[8,9,8,1], index: 1, kind: input, shape index: {}]
  %s2 = inlined_call_operand.vmem [shape: f32[8], index: 2, kind: input, shape index: {}]
  %s3 = inlined_call_operand.hbm [shape: f32[2,8,256], index: 3, kind: output, shape index: {}]
  %s4 = sld [smem:[#allocation0]]
  $region26: #{tpu_custom_call.1} parent=0
    _
  %s6 = ssub.s32 1, %s4
  %s7 = scalar_select 0, %s6, %s4
  $region1: #{tpu_custom_call.1} parent=0
    #allocation2 [shape = 'u8[512]{0}', space=smem, size = 0x200, scoped, tag = 'input window, operand 2, single buffered']
    #allocation3 [shape = 's32[1]{0}', space=sflag, size = 0x4, scoped, tag = 'scoped memory for tpu_custom_call.1']
    #allocation4 [shape = 's32[1]{0}', space=sflag, size = 0x4, scoped, tag = 'scoped memory for tpu_custom_call.1']
    #allocation5 [shape = 'u8[16384]{0}', space=vmem, size = 0x4000, scoped, tag = 'output window, operand 0, single buffered']
    %8 = vsyncpa [#allocation4], 0
    %9 = vsyncpa [#allocation3], 0
    // Predicated region
    $region2: #{tpu_custom_call.1} parent=1 // pred_check
      _
    $region3: #{tpu_custom_call.1} parent=1 // pred_check_branch
      %11 = sbr.rel (0) target = $region5
    $region4: #{tpu_custom_call.1} parent=1 // pred_region
      _
    $region5: #{tpu_custom_call.1} parent=1 // pred_fallthru
      _
    // Predicated region
    $region6: #{tpu_custom_call.1} parent=1 // pred_check
      _
    $region7: #{tpu_custom_call.1} parent=1 // pred_check_branch
      %13 = sbr.rel (0) target = $region9
    $region8: #{tpu_custom_call.1} parent=1 // pred_region
      _
    $region9: #{tpu_custom_call.1} parent=1 // pred_fallthru
      _
    // Predicated region
    $region10: #{tpu_custom_call.1} parent=1 // pred_check
      _
    $region11: #{tpu_custom_call.1} parent=1 // pred_check_branch
      %15 = sbr.rel (0) target = $region13
    $region12: #{tpu_custom_call.1} parent=1 // pred_region
      %s17 = ssub.s32 16, 16
      %18 = vsyncadd [#allocation4], %s17
      %s20 = sshll.u32 %s2, 4
      %s21 = int_to_ptr.vmem [resolvable:$true] %s20
      %23 = dma.vmem_to_smem %s21, 16, [#allocation2], [#allocation4]
    $region13: #{tpu_custom_call.1} parent=1 // pred_fallthru
      _
    // Predicated region
    $region14: #{tpu_custom_call.1} parent=1 // pred_check
      _
    $region15: #{tpu_custom_call.1} parent=1 // pred_check_branch
      %25 = sbr.rel (0) target = $region17
    $region16: #{tpu_custom_call.1} parent=1 // pred_region
      %26 = dma.done [#allocation4], 16
    $region17: #{tpu_custom_call.1} parent=1 // pred_fallthru
      _
    %27 = sfence
    %v28 = vld [vmem:[%s0] sm:$0xff]
    %v29 = vld [vmem:[%s0 + $0x8] sm:$0xff]
    %v30 = vld [vmem:[%s1] sm:$0xff]
    %32 = vset.pattern.permute.xlu0 0
    %33 = vperm.xlu0 %32, %v30
    %v34 = vpop.permute.xlu0 %33
    %v36 = vmul.f32 %v28, %v34
    %v37 = vmul.f32 %v29, %v34
    %v38 = vadd.f32 %v36, 0.0
    %v39 = vadd.f32 %v37, 0.0
    %s40 = scalar_lea.vmem %s1, 72
    %v41 = vld [vmem:[%s40] sm:$0xff]
    %43 = vset.pattern.permute.xlu0 0
    %44 = vperm.xlu0 %43, %v41
    %v45 = vpop.permute.xlu0 %44
    %v47 = vmul.f32 %v28, %v45
    %v48 = vmul.f32 %v29, %v45
    %v49 = vadd.f32 %v47, 0.0
    %v50 = vadd.f32 %v48, 0.0
    %s51 = scalar_lea.vmem %s1, 144
    %v52 = vld [vmem:[%s51] sm:$0xff]
    %54 = vset.pattern.permute.xlu0 0
    %55 = vperm.xlu0 %54, %v52
    %v56 = vpop.permute.xlu0 %55
    %v58 = vmul.f32 %v28, %v56
    %v59 = vmul.f32 %v29, %v56
    %v60 = vadd.f32 %v58, 0.0
    %v61 = vadd.f32 %v59, 0.0
    %s62 = scalar_lea.vmem %s1, 216
    %v63 = vld [vmem:[%s62] sm:$0xff]
    %65 = vset.pattern.permute.xlu0 0
    %66 = vperm.xlu0 %65, %v63
    %v67 = vpop.permute.xlu0 %66
    %v69 = vmul.f32 %v28, %v67
    %v70 = vmul.f32 %v29, %v67
    %v71 = vadd.f32 %v69, 0.0
    %v72 = vadd.f32 %v70, 0.0
    %73 = vrot.lane.b32.xlu0 %v28, 127
    %v74 = vpop.permute.xlu0 %73
    %75 = vrot.lane.b32.xlu0 %v29, 127
    %v76 = vpop.permute.xlu0 %75
    %v77 = vlaneseq
    %v78 = vand.u32 %v77, 127
    %vm79 = vcmp.lt.s32.totalorder %v78, 127
    %v80 = vsel %vm79, %v74, %v76
    %v81 = vsel %vm79, %v76, %v74
    %s82 = scalar_lea.vmem %s1, 8
    %v83 = vld [vmem:[%s82] sm:$0xff]
    %85 = vset.pattern.permute.xlu0 0
    %86 = vperm.xlu0 %85, %v83
    %v87 = vpop.permute.xlu0 %86
    %v89 = vmul.f32 %v80, %v87
    %v90 = vmul.f32 %v81, %v87
    %v91 = vadd.f32 %v38, %v89
    %v92 = vadd.f32 %v39, %v90
    %s93 = scalar_lea.vmem %s1, 80
    %v94 = vld [vmem:[%s93] sm:$0xff]
    %96 = vset.pattern.permute.xlu0 0
    %97 = vperm.xlu0 %96, %v94
    %v98 = vpop.permute.xlu0 %97
    %v100 = vmul.f32 %v80, %v98
    %v101 = vmul.f32 %v81, %v98
    %v102 = vadd.f32 %v49, %v100
    %v103 = vadd.f32 %v50, %v101
    %s104 = scalar_lea.vmem %s1, 152
    %v105 = vld [vmem:[%s104] sm:$0xff]
    %107 = vset.pattern.permute.xlu0 0
    %108 = vperm.xlu0 %107, %v105
    %v109 = vpop.permute.xlu0 %108
    %v111 = vmul.f32 %v80, %v109
    %v112 = vmul.f32 %v81, %v109
    %v113 = vadd.f32 %v60, %v111
    %v114 = vadd.f32 %v61, %v112
    %s115 = scalar_lea.vmem %s1, 224
    %v116 = vld [vmem:[%s115] sm:$0xff]
    %118 = vset.pattern.permute.xlu0 0
    %119 = vperm.xlu0 %118, %v116
    %v120 = vpop.permute.xlu0 %119
    %v122 = vmul.f32 %v80, %v120
    %v123 = vmul.f32 %v81, %v120
    %v124 = vadd.f32 %v71, %v122
    %v125 = vadd.f32 %v72, %v123
    %126 = vrot.lane.b32.xlu0 %v28, 126
    %v127 = vpop.permute.xlu0 %126
    %128 = vrot.lane.b32.xlu0 %v29, 126
    %v129 = vpop.permute.xlu0 %128
    %vm130 = vcmp.lt.s32.totalorder %v78, 126
    %v131 = vsel %vm130, %v127, %v129
    %v132 = vsel %vm130, %v129, %v127
    %s133 = scalar_lea.vmem %s1, 16
    %v134 = vld [vmem:[%s133] sm:$0xff]
    %136 = vset.pattern.permute.xlu0 0
    %137 = vperm.xlu0 %136, %v134
    %v138 = vpop.permute.xlu0 %137
    %v140 = vmul.f32 %v131, %v138
    %v141 = vmul.f32 %v132, %v138
    %v142 = vadd.f32 %v91, %v140
    %v143 = vadd.f32 %v92, %v141
    %s144 = scalar_lea.vmem %s1, 88
    %v145 = vld [vmem:[%s144] sm:$0xff]
    %147 = vset.pattern.permute.xlu0 0
    %148 = vperm.xlu0 %147, %v145
    %v149 = vpop.permute.xlu0 %148
    %v151 = vmul.f32 %v131, %v149
    %v152 = vmul.f32 %v132, %v149
    %v153 = vadd.f32 %v102, %v151
    %v154 = vadd.f32 %v103, %v152
    %s155 = scalar_lea.vmem %s1, 160
    %v156 = vld [vmem:[%s155] sm:$0xff]
    %158 = vset.pattern.permute.xlu0 0
    %159 = vperm.xlu0 %158, %v156
    %v160 = vpop.permute.xlu0 %159
    %v162 = vmul.f32 %v131, %v160
    %v163 = vmul.f32 %v132, %v160
    %v164 = vadd.f32 %v113, %v162
    %v165 = vadd.f32 %v114, %v163
    %s166 = scalar_lea.vmem %s1, 232
    %v167 = vld [vmem:[%s166] sm:$0xff]
    %169 = vset.pattern.permute.xlu0 0
    %170 = vperm.xlu0 %169, %v167
    %v171 = vpop.permute.xlu0 %170
    %v173 = vmul.f32 %v131, %v171
    %v174 = vmul.f32 %v132, %v171
    %v175 = vadd.f32 %v124, %v173
    %v176 = vadd.f32 %v125, %v174
    %177 = vrot.lane.b32.xlu0 %v28, 112
    %v178 = vpop.permute.xlu0 %177
    %179 = vrot.lane.b32.xlu0 %v29, 112
    %v180 = vpop.permute.xlu0 %179
    %vm181 = vcmp.lt.s32.totalorder %v78, 112
    %v182 = vsel %vm181, %v178, %v180
    %v183 = vsel %vm181, %v180, %v178
    %s184 = scalar_lea.vmem %s1, 24
    %v185 = vld [vmem:[%s184] sm:$0xff]
    %187 = vset.pattern.permute.xlu0 0
    %188 = vperm.xlu0 %187, %v185
    %v189 = vpop.permute.xlu0 %188
    %v191 = vmul.f32 %v182, %v189
    %v192 = vmul.f32 %v183, %v189
    %v193 = vadd.f32 %v142, %v191
    %v194 = vadd.f32 %v143, %v192
    %s195 = scalar_lea.vmem %s1, 96
    %v196 = vld [vmem:[%s195] sm:$0xff]
    %198 = vset.pattern.permute.xlu0 0
    %199 = vperm.xlu0 %198, %v196
    %v200 = vpop.permute.xlu0 %199
    %v202 = vmul.f32 %v182, %v200
    %v203 = vmul.f32 %v183, %v200
    %v204 = vadd.f32 %v153, %v202
    %v205 = vadd.f32 %v154, %v203
    %s206 = scalar_lea.vmem %s1, 168
    %v207 = vld [vmem:[%s206] sm:$0xff]
    %209 = vset.pattern.permute.xlu0 0
    %210 = vperm.xlu0 %209, %v207
    %v211 = vpop.permute.xlu0 %210
    %v213 = vmul.f32 %v182, %v211
    %v214 = vmul.f32 %v183, %v211
    %v215 = vadd.f32 %v164, %v213
    %v216 = vadd.f32 %v165, %v214
    %s217 = scalar_lea.vmem %s1, 240
    %v218 = vld [vmem:[%s217] sm:$0xff]
    %220 = vset.pattern.permute.xlu0 0
    %221 = vperm.xlu0 %220, %v218
    %v222 = vpop.permute.xlu0 %221
    %v224 = vmul.f32 %v182, %v222
    %v225 = vmul.f32 %v183, %v222
    %v226 = vadd.f32 %v175, %v224
    %v227 = vadd.f32 %v176, %v225
    %228 = vrot.lane.b32.xlu0 %v28, 111
    %v229 = vpop.permute.xlu0 %228
    %230 = vrot.lane.b32.xlu0 %v29, 111
    %v231 = vpop.permute.xlu0 %230
    %vm232 = vcmp.lt.s32.totalorder %v78, 111
    %v233 = vsel %vm232, %v229, %v231
    %v234 = vsel %vm232, %v231, %v229
    %s235 = scalar_lea.vmem %s1, 32
    %v236 = vld [vmem:[%s235] sm:$0xff]
    %238 = vset.pattern.permute.xlu0 0
    %239 = vperm.xlu0 %238, %v236
    %v240 = vpop.permute.xlu0 %239
    %v242 = vmul.f32 %v233, %v240
    %v243 = vmul.f32 %v234, %v240
    %v244 = vadd.f32 %v193, %v242
    %v245 = vadd.f32 %v194, %v243
    %s246 = scalar_lea.vmem %s1, 104
    %v247 = vld [vmem:[%s246] sm:$0xff]
    %249 = vset.pattern.permute.xlu0 0
    %250 = vperm.xlu0 %249, %v247
    %v251 = vpop.permute.xlu0 %250
    %v253 = vmul.f32 %v233, %v251
    %v254 = vmul.f32 %v234, %v251
    %v255 = vadd.f32 %v204, %v253
    %v256 = vadd.f32 %v205, %v254
    %s257 = scalar_lea.vmem %s1, 176
    %v258 = vld [vmem:[%s257] sm:$0xff]
    %260 = vset.pattern.permute.xlu0 0
    %261 = vperm.xlu0 %260, %v258
    %v262 = vpop.permute.xlu0 %261
    %v264 = vmul.f32 %v233, %v262
    %v265 = vmul.f32 %v234, %v262
    %v266 = vadd.f32 %v215, %v264
    %v267 = vadd.f32 %v216, %v265
    %s268 = scalar_lea.vmem %s1, 248
    %v269 = vld [vmem:[%s268] sm:$0xff]
    %271 = vset.pattern.permute.xlu0 0
    %272 = vperm.xlu0 %271, %v269
    %v273 = vpop.permute.xlu0 %272
    %v275 = vmul.f32 %v233, %v273
    %v276 = vmul.f32 %v234, %v273
    %v277 = vadd.f32 %v226, %v275
    %v278 = vadd.f32 %v227, %v276
    %279 = vrot.lane.b32.xlu0 %v28, 110
    %v280 = vpop.permute.xlu0 %279
    %281 = vrot.lane.b32.xlu0 %v29, 110
    %v282 = vpop.permute.xlu0 %281
    %vm283 = vcmp.lt.s32.totalorder %v78, 110
    %v284 = vsel %vm283, %v280, %v282
    %v285 = vsel %vm283, %v282, %v280
    %s286 = scalar_lea.vmem %s1, 40
    %v287 = vld [vmem:[%s286] sm:$0xff]
    %289 = vset.pattern.permute.xlu0 0
    %290 = vperm.xlu0 %289, %v287
    %v291 = vpop.permute.xlu0 %290
    %v293 = vmul.f32 %v284, %v291
    %v294 = vmul.f32 %v285, %v291
    %v295 = vadd.f32 %v244, %v293
    %v296 = vadd.f32 %v245, %v294
    %s297 = scalar_lea.vmem %s1, 112
    %v298 = vld [vmem:[%s297] sm:$0xff]
    %300 = vset.pattern.permute.xlu0 0
    %301 = vperm.xlu0 %300, %v298
    %v302 = vpop.permute.xlu0 %301
    %v304 = vmul.f32 %v284, %v302
    %v305 = vmul.f32 %v285, %v302
    %v306 = vadd.f32 %v255, %v304
    %v307 = vadd.f32 %v256, %v305
    %s308 = scalar_lea.vmem %s1, 184
    %v309 = vld [vmem:[%s308] sm:$0xff]
    %311 = vset.pattern.permute.xlu0 0
    %312 = vperm.xlu0 %311, %v309
    %v313 = vpop.permute.xlu0 %312
    %v315 = vmul.f32 %v284, %v313
    %v316 = vmul.f32 %v285, %v313
    %v317 = vadd.f32 %v266, %v315
    %v318 = vadd.f32 %v267, %v316
    %s319 = scalar_lea.vmem %s1, 256
    %v320 = vld [vmem:[%s319] sm:$0xff]
    %322 = vset.pattern.permute.xlu0 0
    %323 = vperm.xlu0 %322, %v320
    %v324 = vpop.permute.xlu0 %323
    %v326 = vmul.f32 %v284, %v324
    %v327 = vmul.f32 %v285, %v324
    %v328 = vadd.f32 %v277, %v326
    %v329 = vadd.f32 %v278, %v327
    %330 = vrot.lane.b32.xlu0 %v28, 96
    %v331 = vpop.permute.xlu0 %330
    %332 = vrot.lane.b32.xlu0 %v29, 96
    %v333 = vpop.permute.xlu0 %332
    %vm334 = vcmp.lt.s32.totalorder %v78, 96
    %v335 = vsel %vm334, %v331, %v333
    %v336 = vsel %vm334, %v333, %v331
    %s337 = scalar_lea.vmem %s1, 48
    %v338 = vld [vmem:[%s337] sm:$0xff]
    %340 = vset.pattern.permute.xlu0 0
    %341 = vperm.xlu0 %340, %v338
    %v342 = vpop.permute.xlu0 %341
    %v344 = vmul.f32 %v335, %v342
    %v345 = vmul.f32 %v336, %v342
    %v346 = vadd.f32 %v295, %v344
    %v347 = vadd.f32 %v296, %v345
    %s348 = scalar_lea.vmem %s1, 120
    %v349 = vld [vmem:[%s348] sm:$0xff]
    %351 = vset.pattern.permute.xlu0 0
    %352 = vperm.xlu0 %351, %v349
    %v353 = vpop.permute.xlu0 %352
    %v355 = vmul.f32 %v335, %v353
    %v356 = vmul.f32 %v336, %v353
    %v357 = vadd.f32 %v306, %v355
    %v358 = vadd.f32 %v307, %v356
    %s359 = scalar_lea.vmem %s1, 192
    %v360 = vld [vmem:[%s359] sm:$0xff]
    %362 = vset.pattern.permute.xlu0 0
    %363 = vperm.xlu0 %362, %v360
    %v364 = vpop.permute.xlu0 %363
    %v366 = vmul.f32 %v335, %v364
    %v367 = vmul.f32 %v336, %v364
    %v368 = vadd.f32 %v317, %v366
    %v369 = vadd.f32 %v318, %v367
    %s370 = scalar_lea.vmem %s1, 264
    %v371 = vld [vmem:[%s370] sm:$0xff]
    %373 = vset.pattern.permute.xlu0 0
    %374 = vperm.xlu0 %373, %v371
    %v375 = vpop.permute.xlu0 %374
    %v377 = vmul.f32 %v335, %v375
    %v378 = vmul.f32 %v336, %v375
    %v379 = vadd.f32 %v328, %v377
    %v380 = vadd.f32 %v329, %v378
    %381 = vrot.lane.b32.xlu0 %v28, 95
    %v382 = vpop.permute.xlu0 %381
    %383 = vrot.lane.b32.xlu0 %v29, 95
    %v384 = vpop.permute.xlu0 %383
    %vm385 = vcmp.lt.s32.totalorder %v78, 95
    %v386 = vsel %vm385, %v382, %v384
    %v387 = vsel %vm385, %v384, %v382
    %s388 = scalar_lea.vmem %s1, 56
    %v389 = vld [vmem:[%s388] sm:$0xff]
    %391 = vset.pattern.permute.xlu0 0
    %392 = vperm.xlu0 %391, %v389
    %v393 = vpop.permute.xlu0 %392
    %v395 = vmul.f32 %v386, %v393
    %v396 = vmul.f32 %v387, %v393
    %v397 = vadd.f32 %v346, %v395
    %v398 = vadd.f32 %v347, %v396
    %s399 = scalar_lea.vmem %s1, 128
    %v400 = vld [vmem:[%s399] sm:$0xff]
    %402 = vset.pattern.permute.xlu0 0
    %403 = vperm.xlu0 %402, %v400
    %v404 = vpop.permute.xlu0 %403
    %v406 = vmul.f32 %v386, %v404
    %v407 = vmul.f32 %v387, %v404
    %v408 = vadd.f32 %v357, %v406
    %v409 = vadd.f32 %v358, %v407
    %s410 = scalar_lea.vmem %s1, 200
    %v411 = vld [vmem:[%s410] sm:$0xff]
    %413 = vset.pattern.permute.xlu0 0
    %414 = vperm.xlu0 %413, %v411
    %v415 = vpop.permute.xlu0 %414
    %v417 = vmul.f32 %v386, %v415
    %v418 = vmul.f32 %v387, %v415
    %v419 = vadd.f32 %v368, %v417
    %v420 = vadd.f32 %v369, %v418
    %s421 = scalar_lea.vmem %s1, 272
    %v422 = vld [vmem:[%s421] sm:$0xff]
    %424 = vset.pattern.permute.xlu0 0
    %425 = vperm.xlu0 %424, %v422
    %v426 = vpop.permute.xlu0 %425
    %v428 = vmul.f32 %v386, %v426
    %v429 = vmul.f32 %v387, %v426
    %v430 = vadd.f32 %v379, %v428
    %v431 = vadd.f32 %v380, %v429
    %432 = vrot.lane.b32.xlu0 %v28, 94
    %v433 = vpop.permute.xlu0 %432
    %434 = vrot.lane.b32.xlu0 %v29, 94
    %v435 = vpop.permute.xlu0 %434
    %vm436 = vcmp.lt.s32.totalorder %v78, 94
    %v437 = vsel %vm436, %v433, %v435
    %v438 = vsel %vm436, %v435, %v433
    %s439 = scalar_lea.vmem %s1, 64
    %v440 = vld [vmem:[%s439] sm:$0xff]
    %442 = vset.pattern.permute.xlu0 0
    %443 = vperm.xlu0 %442, %v440
    %v444 = vpop.permute.xlu0 %443
    %v446 = vmul.f32 %v437, %v444
    %v447 = vmul.f32 %v438, %v444
    %v448 = vadd.f32 %v397, %v446
    %v449 = vadd.f32 %v398, %v447
    %s450 = scalar_lea.vmem %s1, 136
    %v451 = vld [vmem:[%s450] sm:$0xff]
    %453 = vset.pattern.permute.xlu0 0
    %454 = vperm.xlu0 %453, %v451
    %v455 = vpop.permute.xlu0 %454
    %v457 = vmul.f32 %v437, %v455
    %v458 = vmul.f32 %v438, %v455
    %v459 = vadd.f32 %v408, %v457
    %v460 = vadd.f32 %v409, %v458
    %s461 = scalar_lea.vmem %s1, 208
    %v462 = vld [vmem:[%s461] sm:$0xff]
    %464 = vset.pattern.permute.xlu0 0
    %465 = vperm.xlu0 %464, %v462
    %v466 = vpop.permute.xlu0 %465
    %v468 = vmul.f32 %v437, %v466
    %v469 = vmul.f32 %v438, %v466
    %v470 = vadd.f32 %v419, %v468
    %v471 = vadd.f32 %v420, %v469
    %s472 = scalar_lea.vmem %s1, 280
    %v473 = vld [vmem:[%s472] sm:$0xff]
    %475 = vset.pattern.permute.xlu0 0
    %476 = vperm.xlu0 %475, %v473
    %v477 = vpop.permute.xlu0 %476
    %v479 = vmul.f32 %v437, %v477
    %v480 = vmul.f32 %v438, %v477
    %v481 = vadd.f32 %v430, %v479
    %v482 = vadd.f32 %v431, %v480
    %vm483 = vcmask 1043456
    %v484 = vsel %vm483, %v448, 0.0
    %v485 = vrot.slane %v484, 4
    %v486 = vadd.f32 %v484, %v485
    %v487 = vrot.slane %v486, 2
    %v488 = vadd.f32 %v486, %v487
    %v489 = vrot.slane %v488, 1
    %v490 = vadd.f32 %v488, %v489
    %v491 = vsel %vm483, %v449, 0.0
    %v492 = vrot.slane %v491, 4
    %v493 = vadd.f32 %v491, %v492
    %v494 = vrot.slane %v493, 2
    %v495 = vadd.f32 %v493, %v494
    %v496 = vrot.slane %v495, 1
    %v497 = vadd.f32 %v495, %v496
    %s498 = sld [smem:[#allocation2]]
    %v499 = vstv %s498
    %v500 = vadd.f32 %v490, %v499
    %v501 = vadd.f32 %v497, %v499
    %v502 = vsel %vm483, %v459, 0.0
    %v503 = vrot.slane %v502, 4
    %v504 = vadd.f32 %v502, %v503
    %v505 = vrot.slane %v504, 2
    %v506 = vadd.f32 %v504, %v505
    %v507 = vrot.slane %v506, 1
    %v508 = vadd.f32 %v506, %v507
    %v509 = vsel %vm483, %v460, 0.0
    %v510 = vrot.slane %v509, 4
    %v511 = vadd.f32 %v509, %v510
    %v512 = vrot.slane %v511, 2
    %v513 = vadd.f32 %v511, %v512
    %v514 = vrot.slane %v513, 1
    %v515 = vadd.f32 %v513, %v514
    %s516 = sld [smem:[#allocation2 + $0x1]]
    %v517 = vstv %s516
    %v518 = vadd.f32 %v508, %v517
    %v519 = vadd.f32 %v515, %v517
    %v520 = vsel %vm483, %v470, 0.0
    %v521 = vrot.slane %v520, 4
    %v522 = vadd.f32 %v520, %v521
    %v523 = vrot.slane %v522, 2
    %v524 = vadd.f32 %v522, %v523
    %v525 = vrot.slane %v524, 1
    %v526 = vadd.f32 %v524, %v525
    %v527 = vsel %vm483, %v471, 0.0
    %v528 = vrot.slane %v527, 4
    %v529 = vadd.f32 %v527, %v528
    %v530 = vrot.slane %v529, 2
    %v531 = vadd.f32 %v529, %v530
    %v532 = vrot.slane %v531, 1
    %v533 = vadd.f32 %v531, %v532
    %s534 = sld [smem:[#allocation2 + $0x2]]
    %v535 = vstv %s534
    %v536 = vadd.f32 %v526, %v535
    %v537 = vadd.f32 %v533, %v535
    %v538 = vsel %vm483, %v481, 0.0
    %v539 = vrot.slane %v538, 4
    %v540 = vadd.f32 %v538, %v539
    %v541 = vrot.slane %v540, 2
    %v542 = vadd.f32 %v540, %v541
    %v543 = vrot.slane %v542, 1
    %v544 = vadd.f32 %v542, %v543
    %v545 = vsel %vm483, %v482, 0.0
    %v546 = vrot.slane %v545, 4
    %v547 = vadd.f32 %v545, %v546
    %v548 = vrot.slane %v547, 2
    %v549 = vadd.f32 %v547, %v548
    %v550 = vrot.slane %v549, 1
    %v551 = vadd.f32 %v549, %v550
    %s552 = sld [smem:[#allocation2 + $0x3]]
    %v553 = vstv %s552
    %v554 = vadd.f32 %v544, %v553
    %v555 = vadd.f32 %v551, %v553
    %vm556 = vcmask 1040384
    %v557 = vsel %vm556, %v500, %v518
    %v558 = vsel %vm556, %v501, %v519
    %vm559 = vcmask 1041408
    %v560 = vsel %vm559, %v557, %v536
    %v561 = vsel %vm559, %v558, %v537
    %vm562 = vcmask 1042432
    %v563 = vsel %vm562, %v560, %v554
    %v564 = vsel %vm562, %v561, %v555
    %v567 = vrot.slane %v448, 4
    %v568 = vrot.slane %v449, 4
    %v571 = vsel %vm483, %v567, 0.0
    %v572 = vrot.slane %v571, 4
    %v573 = vadd.f32 %v571, %v572
    %v574 = vrot.slane %v573, 2
    %v575 = vadd.f32 %v573, %v574
    %v576 = vrot.slane %v575, 1
    %v577 = vadd.f32 %v575, %v576
    %v578 = vsel %vm483, %v568, 0.0
    %v579 = vrot.slane %v578, 4
    %v580 = vadd.f32 %v578, %v579
    %v581 = vrot.slane %v580, 2
    %v582 = vadd.f32 %v580, %v581
    %v583 = vrot.slane %v582, 1
    %v584 = vadd.f32 %v582, %v583
    %v585 = vadd.f32 %v577, %v499
    %v586 = vadd.f32 %v584, %v499
    %v589 = vrot.slane %v459, 4
    %v590 = vrot.slane %v460, 4
    %v593 = vsel %vm483, %v589, 0.0
    %v594 = vrot.slane %v593, 4
    %v595 = vadd.f32 %v593, %v594
    %v596 = vrot.slane %v595, 2
    %v597 = vadd.f32 %v595, %v596
    %v598 = vrot.slane %v597, 1
    %v599 = vadd.f32 %v597, %v598
    %v600 = vsel %vm483, %v590, 0.0
    %v601 = vrot.slane %v600, 4
    %v602 = vadd.f32 %v600, %v601
    %v603 = vrot.slane %v602, 2
    %v604 = vadd.f32 %v602, %v603
    %v605 = vrot.slane %v604, 1
    %v606 = vadd.f32 %v604, %v605
    %v607 = vadd.f32 %v599, %v517
    %v608 = vadd.f32 %v606, %v517
    %v611 = vrot.slane %v470, 4
    %v612 = vrot.slane %v471, 4
    %v615 = vsel %vm483, %v611, 0.0
    %v616 = vrot.slane %v615, 4
    %v617 = vadd.f32 %v615, %v616
    %v618 = vrot.slane %v617, 2
    %v619 = vadd.f32 %v617, %v618
    %v620 = vrot.slane %v619, 1
    %v621 = vadd.f32 %v619, %v620
    %v622 = vsel %vm483, %v612, 0.0
    %v623 = vrot.slane %v622, 4
    %v624 = vadd.f32 %v622, %v623
    %v625 = vrot.slane %v624, 2
    %v626 = vadd.f32 %v624, %v625
    %v627 = vrot.slane %v626, 1
    %v628 = vadd.f32 %v626, %v627
    %v629 = vadd.f32 %v621, %v535
    %v630 = vadd.f32 %v628, %v535
    %v633 = vrot.slane %v481, 4
    %v634 = vrot.slane %v482, 4
    %v637 = vsel %vm483, %v633, 0.0
    %v638 = vrot.slane %v637, 4
    %v639 = vadd.f32 %v637, %v638
    %v640 = vrot.slane %v639, 2
    %v641 = vadd.f32 %v639, %v640
    %v642 = vrot.slane %v641, 1
    %v643 = vadd.f32 %v641, %v642
    %v644 = vsel %vm483, %v634, 0.0
    %v645 = vrot.slane %v644, 4
    %v646 = vadd.f32 %v644, %v645
    %v647 = vrot.slane %v646, 2
    %v648 = vadd.f32 %v646, %v647
    %v649 = vrot.slane %v648, 1
    %v650 = vadd.f32 %v648, %v649
    %v651 = vadd.f32 %v643, %v553
    %v652 = vadd.f32 %v650, %v553
    %v653 = vsel %vm556, %v585, %v607
    %v654 = vsel %vm556, %v586, %v608
    %v655 = vsel %vm559, %v653, %v629
    %v656 = vsel %vm559, %v654, %v630
    %v657 = vsel %vm562, %v655, %v651
    %v658 = vsel %vm562, %v656, %v652
    %659 = vst [vmem:[#allocation5] sm:$0xf] %v563
    %660 = vst [vmem:[#allocation5 + $0x8] sm:$0xf] %v564
    %661 = vst [vmem:[#allocation5 + $0x10] sm:$0xf] %v657
    %662 = vst [vmem:[#allocation5 + $0x18] sm:$0xf] %v658
    %s663 = scalar_lea.vmem %s0, 16
    %v664 = vld [vmem:[%s663] sm:$0xff]
    %v665 = vld [vmem:[%s663 + $0x8] sm:$0xff]
    %s666 = scalar_lea.vmem %s1, 288
    %v667 = vld [vmem:[%s666] sm:$0xff]
    %669 = vset.pattern.permute.xlu0 0
    %670 = vperm.xlu0 %669, %v667
    %v671 = vpop.permute.xlu0 %670
    %v673 = vmul.f32 %v664, %v671
    %v674 = vmul.f32 %v665, %v671
    %v675 = vadd.f32 %v673, 0.0
    %v676 = vadd.f32 %v674, 0.0
    %s677 = scalar_lea.vmem %s1, 360
    %v678 = vld [vmem:[%s677] sm:$0xff]
    %680 = vset.pattern.permute.xlu0 0
    %681 = vperm.xlu0 %680, %v678
    %v682 = vpop.permute.xlu0 %681
    %v684 = vmul.f32 %v664, %v682
    %v685 = vmul.f32 %v665, %v682
    %v686 = vadd.f32 %v684, 0.0
    %v687 = vadd.f32 %v685, 0.0
    %s688 = scalar_lea.vmem %s1, 432
    %v689 = vld [vmem:[%s688] sm:$0xff]
    %691 = vset.pattern.permute.xlu0 0
    %692 = vperm.xlu0 %691, %v689
    %v693 = vpop.permute.xlu0 %692
    %v695 = vmul.f32 %v664, %v693
    %v696 = vmul.f32 %v665, %v693
    %v697 = vadd.f32 %v695, 0.0
    %v698 = vadd.f32 %v696, 0.0
    %s699 = scalar_lea.vmem %s1, 504
    %v700 = vld [vmem:[%s699] sm:$0xff]
    %702 = vset.pattern.permute.xlu0 0
    %703 = vperm.xlu0 %702, %v700
    %v704 = vpop.permute.xlu0 %703
    %v706 = vmul.f32 %v664, %v704
    %v707 = vmul.f32 %v665, %v704
    %v708 = vadd.f32 %v706, 0.0
    %v709 = vadd.f32 %v707, 0.0
    %710 = vrot.lane.b32.xlu0 %v664, 127
    %v711 = vpop.permute.xlu0 %710
    %712 = vrot.lane.b32.xlu0 %v665, 127
    %v713 = vpop.permute.xlu0 %712
    %v714 = vsel %vm79, %v711, %v713
    %v715 = vsel %vm79, %v713, %v711
    %s716 = scalar_lea.vmem %s1, 296
    %v717 = vld [vmem:[%s716] sm:$0xff]
    %719 = vset.pattern.permute.xlu0 0
    %720 = vperm.xlu0 %719, %v717
    %v721 = vpop.permute.xlu0 %720
    %v723 = vmul.f32 %v714, %v721
    %v724 = vmul.f32 %v715, %v721
    %v725 = vadd.f32 %v675, %v723
    %v726 = vadd.f32 %v676, %v724
    %s727 = scalar_lea.vmem %s1, 368
    %v728 = vld [vmem:[%s727] sm:$0xff]
    %730 = vset.pattern.permute.xlu0 0
    %731 = vperm.xlu0 %730, %v728
    %v732 = vpop.permute.xlu0 %731
    %v734 = vmul.f32 %v714, %v732
    %v735 = vmul.f32 %v715, %v732
    %v736 = vadd.f32 %v686, %v734
    %v737 = vadd.f32 %v687, %v735
    %s738 = scalar_lea.vmem %s1, 440
    %v739 = vld [vmem:[%s738] sm:$0xff]
    %741 = vset.pattern.permute.xlu0 0
    %742 = vperm.xlu0 %741, %v739
    %v743 = vpop.permute.xlu0 %742
    %v745 = vmul.f32 %v714, %v743
    %v746 = vmul.f32 %v715, %v743
    %v747 = vadd.f32 %v697, %v745
    %v748 = vadd.f32 %v698, %v746
    %s749 = scalar_lea.vmem %s1, 512
    %v750 = vld [vmem:[%s749] sm:$0xff]
    %752 = vset.pattern.permute.xlu0 0
    %753 = vperm.xlu0 %752, %v750
    %v754 = vpop.permute.xlu0 %753
    %v756 = vmul.f32 %v714, %v754
    %v757 = vmul.f32 %v715, %v754
    %v758 = vadd.f32 %v708, %v756
    %v759 = vadd.f32 %v709, %v757
    %760 = vrot.lane.b32.xlu0 %v664, 126
    %v761 = vpop.permute.xlu0 %760
    %762 = vrot.lane.b32.xlu0 %v665, 126
    %v763 = vpop.permute.xlu0 %762
    %v764 = vsel %vm130, %v761, %v763
    %v765 = vsel %vm130, %v763, %v761
    %s766 = scalar_lea.vmem %s1, 304
    %v767 = vld [vmem:[%s766] sm:$0xff]
    %769 = vset.pattern.permute.xlu0 0
    %770 = vperm.xlu0 %769, %v767
    %v771 = vpop.permute.xlu0 %770
    %v773 = vmul.f32 %v764, %v771
    %v774 = vmul.f32 %v765, %v771
    %v775 = vadd.f32 %v725, %v773
    %v776 = vadd.f32 %v726, %v774
    %s777 = scalar_lea.vmem %s1, 376
    %v778 = vld [vmem:[%s777] sm:$0xff]
    %780 = vset.pattern.permute.xlu0 0
    %781 = vperm.xlu0 %780, %v778
    %v782 = vpop.permute.xlu0 %781
    %v784 = vmul.f32 %v764, %v782
    %v785 = vmul.f32 %v765, %v782
    %v786 = vadd.f32 %v736, %v784
    %v787 = vadd.f32 %v737, %v785
    %s788 = scalar_lea.vmem %s1, 448
    %v789 = vld [vmem:[%s788] sm:$0xff]
    %791 = vset.pattern.permute.xlu0 0
    %792 = vperm.xlu0 %791, %v789
    %v793 = vpop.permute.xlu0 %792
    %v795 = vmul.f32 %v764, %v793
    %v796 = vmul.f32 %v765, %v793
    %v797 = vadd.f32 %v747, %v795
    %v798 = vadd.f32 %v748, %v796
    %s799 = scalar_lea.vmem %s1, 520
    %v800 = vld [vmem:[%s799] sm:$0xff]
    %802 = vset.pattern.permute.xlu0 0
    %803 = vperm.xlu0 %802, %v800
    %v804 = vpop.permute.xlu0 %803
    %v806 = vmul.f32 %v764, %v804
    %v807 = vmul.f32 %v765, %v804
    %v808 = vadd.f32 %v758, %v806
    %v809 = vadd.f32 %v759, %v807
    %810 = vrot.lane.b32.xlu0 %v664, 112
    %v811 = vpop.permute.xlu0 %810
    %812 = vrot.lane.b32.xlu0 %v665, 112
    %v813 = vpop.permute.xlu0 %812
    %v814 = vsel %vm181, %v811, %v813
    %v815 = vsel %vm181, %v813, %v811
    %s816 = scalar_lea.vmem %s1, 312
    %v817 = vld [vmem:[%s816] sm:$0xff]
    %819 = vset.pattern.permute.xlu0 0
    %820 = vperm.xlu0 %819, %v817
    %v821 = vpop.permute.xlu0 %820
    %v823 = vmul.f32 %v814, %v821
    %v824 = vmul.f32 %v815, %v821
    %v825 = vadd.f32 %v775, %v823
    %v826 = vadd.f32 %v776, %v824
    %s827 = scalar_lea.vmem %s1, 384
    %v828 = vld [vmem:[%s827] sm:$0xff]
    %830 = vset.pattern.permute.xlu0 0
    %831 = vperm.xlu0 %830, %v828
    %v832 = vpop.permute.xlu0 %831
    %v834 = vmul.f32 %v814, %v832
    %v835 = vmul.f32 %v815, %v832
    %v836 = vadd.f32 %v786, %v834
    %v837 = vadd.f32 %v787, %v835
    %s838 = scalar_lea.vmem %s1, 456
    %v839 = vld [vmem:[%s838] sm:$0xff]
    %841 = vset.pattern.permute.xlu0 0
    %842 = vperm.xlu0 %841, %v839
    %v843 = vpop.permute.xlu0 %842
    %v845 = vmul.f32 %v814, %v843
    %v846 = vmul.f32 %v815, %v843
    %v847 = vadd.f32 %v797, %v845
    %v848 = vadd.f32 %v798, %v846
    %s849 = scalar_lea.vmem %s1, 528
    %v850 = vld [vmem:[%s849] sm:$0xff]
    %852 = vset.pattern.permute.xlu0 0
    %853 = vperm.xlu0 %852, %v850
    %v854 = vpop.permute.xlu0 %853
    %v856 = vmul.f32 %v814, %v854
    %v857 = vmul.f32 %v815, %v854
    %v858 = vadd.f32 %v808, %v856
    %v859 = vadd.f32 %v809, %v857
    %860 = vrot.lane.b32.xlu0 %v664, 111
    %v861 = vpop.permute.xlu0 %860
    %862 = vrot.lane.b32.xlu0 %v665, 111
    %v863 = vpop.permute.xlu0 %862
    %v864 = vsel %vm232, %v861, %v863
    %v865 = vsel %vm232, %v863, %v861
    %s866 = scalar_lea.vmem %s1, 320
    %v867 = vld [vmem:[%s866] sm:$0xff]
    %869 = vset.pattern.permute.xlu0 0
    %870 = vperm.xlu0 %869, %v867
    %v871 = vpop.permute.xlu0 %870
    %v873 = vmul.f32 %v864, %v871
    %v874 = vmul.f32 %v865, %v871
    %v875 = vadd.f32 %v825, %v873
    %v876 = vadd.f32 %v826, %v874
    %s877 = scalar_lea.vmem %s1, 392
    %v878 = vld [vmem:[%s877] sm:$0xff]
    %880 = vset.pattern.permute.xlu0 0
    %881 = vperm.xlu0 %880, %v878
    %v882 = vpop.permute.xlu0 %881
    %v884 = vmul.f32 %v864, %v882
    %v885 = vmul.f32 %v865, %v882
    %v886 = vadd.f32 %v836, %v884
    %v887 = vadd.f32 %v837, %v885
    %s888 = scalar_lea.vmem %s1, 464
    %v889 = vld [vmem:[%s888] sm:$0xff]
    %891 = vset.pattern.permute.xlu0 0
    %892 = vperm.xlu0 %891, %v889
    %v893 = vpop.permute.xlu0 %892
    %v895 = vmul.f32 %v864, %v893
    %v896 = vmul.f32 %v865, %v893
    %v897 = vadd.f32 %v847, %v895
    %v898 = vadd.f32 %v848, %v896
    %s899 = scalar_lea.vmem %s1, 536
    %v900 = vld [vmem:[%s899] sm:$0xff]
    %902 = vset.pattern.permute.xlu0 0
    %903 = vperm.xlu0 %902, %v900
    %v904 = vpop.permute.xlu0 %903
    %v906 = vmul.f32 %v864, %v904
    %v907 = vmul.f32 %v865, %v904
    %v908 = vadd.f32 %v858, %v906
    %v909 = vadd.f32 %v859, %v907
    %910 = vrot.lane.b32.xlu0 %v664, 110
    %v911 = vpop.permute.xlu0 %910
    %912 = vrot.lane.b32.xlu0 %v665, 110
    %v913 = vpop.permute.xlu0 %912
    %v914 = vsel %vm283, %v911, %v913
    %v915 = vsel %vm283, %v913, %v911
    %s916 = scalar_lea.vmem %s1, 328
    %v917 = vld [vmem:[%s916] sm:$0xff]
    %919 = vset.pattern.permute.xlu0 0
    %920 = vperm.xlu0 %919, %v917
    %v921 = vpop.permute.xlu0 %920
    %v923 = vmul.f32 %v914, %v921
    %v924 = vmul.f32 %v915, %v921
    %v925 = vadd.f32 %v875, %v923
    %v926 = vadd.f32 %v876, %v924
    %s927 = scalar_lea.vmem %s1, 400
    %v928 = vld [vmem:[%s927] sm:$0xff]
    %930 = vset.pattern.permute.xlu0 0
    %931 = vperm.xlu0 %930, %v928
    %v932 = vpop.permute.xlu0 %931
    %v934 = vmul.f32 %v914, %v932
    %v935 = vmul.f32 %v915, %v932
    %v936 = vadd.f32 %v886, %v934
    %v937 = vadd.f32 %v887, %v935
    %s938 = scalar_lea.vmem %s1, 472
    %v939 = vld [vmem:[%s938] sm:$0xff]
    %941 = vset.pattern.permute.xlu0 0
    %942 = vperm.xlu0 %941, %v939
    %v943 = vpop.permute.xlu0 %942
    %v945 = vmul.f32 %v914, %v943
    %v946 = vmul.f32 %v915, %v943
    %v947 = vadd.f32 %v897, %v945
    %v948 = vadd.f32 %v898, %v946
    %s949 = scalar_lea.vmem %s1, 544
    %v950 = vld [vmem:[%s949] sm:$0xff]
    %952 = vset.pattern.permute.xlu0 0
    %953 = vperm.xlu0 %952, %v950
    %v954 = vpop.permute.xlu0 %953
    %v956 = vmul.f32 %v914, %v954
    %v957 = vmul.f32 %v915, %v954
    %v958 = vadd.f32 %v908, %v956
    %v959 = vadd.f32 %v909, %v957
    %960 = vrot.lane.b32.xlu0 %v664, 96
    %v961 = vpop.permute.xlu0 %960
    %962 = vrot.lane.b32.xlu0 %v665, 96
    %v963 = vpop.permute.xlu0 %962
    %v964 = vsel %vm334, %v961, %v963
    %v965 = vsel %vm334, %v963, %v961
    %s966 = scalar_lea.vmem %s1, 336
    %v967 = vld [vmem:[%s966] sm:$0xff]
    %969 = vset.pattern.permute.xlu0 0
    %970 = vperm.xlu0 %969, %v967
    %v971 = vpop.permute.xlu0 %970
    %v973 = vmul.f32 %v964, %v971
    %v974 = vmul.f32 %v965, %v971
    %v975 = vadd.f32 %v925, %v973
    %v976 = vadd.f32 %v926, %v974
    %s977 = scalar_lea.vmem %s1, 408
    %v978 = vld [vmem:[%s977] sm:$0xff]
    %980 = vset.pattern.permute.xlu0 0
    %981 = vperm.xlu0 %980, %v978
    %v982 = vpop.permute.xlu0 %981
    %v984 = vmul.f32 %v964, %v982
    %v985 = vmul.f32 %v965, %v982
    %v986 = vadd.f32 %v936, %v984
    %v987 = vadd.f32 %v937, %v985
    %s988 = scalar_lea.vmem %s1, 480
    %v989 = vld [vmem:[%s988] sm:$0xff]
    %991 = vset.pattern.permute.xlu0 0
    %992 = vperm.xlu0 %991, %v989
    %v993 = vpop.permute.xlu0 %992
    %v995 = vmul.f32 %v964, %v993
    %v996 = vmul.f32 %v965, %v993
    %v997 = vadd.f32 %v947, %v995
    %v998 = vadd.f32 %v948, %v996
    %s999 = scalar_lea.vmem %s1, 552
    %v1000 = vld [vmem:[%s999] sm:$0xff]
    %1002 = vset.pattern.permute.xlu0 0
    %1003 = vperm.xlu0 %1002, %v1000
    %v1004 = vpop.permute.xlu0 %1003
    %v1006 = vmul.f32 %v964, %v1004
    %v1007 = vmul.f32 %v965, %v1004
    %v1008 = vadd.f32 %v958, %v1006
    %v1009 = vadd.f32 %v959, %v1007
    %1010 = vrot.lane.b32.xlu0 %v664, 95
    %v1011 = vpop.permute.xlu0 %1010
    %1012 = vrot.lane.b32.xlu0 %v665, 95
    %v1013 = vpop.permute.xlu0 %1012
    %v1014 = vsel %vm385, %v1011, %v1013
    %v1015 = vsel %vm385, %v1013, %v1011
    %s1016 = scalar_lea.vmem %s1, 344
    %v1017 = vld [vmem:[%s1016] sm:$0xff]
    %1019 = vset.pattern.permute.xlu0 0
    %1020 = vperm.xlu0 %1019, %v1017
    %v1021 = vpop.permute.xlu0 %1020
    %v1023 = vmul.f32 %v1014, %v1021
    %v1024 = vmul.f32 %v1015, %v1021
    %v1025 = vadd.f32 %v975, %v1023
    %v1026 = vadd.f32 %v976, %v1024
    %s1027 = scalar_lea.vmem %s1, 416
    %v1028 = vld [vmem:[%s1027] sm:$0xff]
    %1030 = vset.pattern.permute.xlu0 0
    %1031 = vperm.xlu0 %1030, %v1028
    %v1032 = vpop.permute.xlu0 %1031
    %v1034 = vmul.f32 %v1014, %v1032
    %v1035 = vmul.f32 %v1015, %v1032
    %v1036 = vadd.f32 %v986, %v1034
    %v1037 = vadd.f32 %v987, %v1035
    %s1038 = scalar_lea.vmem %s1, 488
    %v1039 = vld [vmem:[%s1038] sm:$0xff]
    %1041 = vset.pattern.permute.xlu0 0
    %1042 = vperm.xlu0 %1041, %v1039
    %v1043 = vpop.permute.xlu0 %1042
    %v1045 = vmul.f32 %v1014, %v1043
    %v1046 = vmul.f32 %v1015, %v1043
    %v1047 = vadd.f32 %v997, %v1045
    %v1048 = vadd.f32 %v998, %v1046
    %s1049 = scalar_lea.vmem %s1, 560
    %v1050 = vld [vmem:[%s1049] sm:$0xff]
    %1052 = vset.pattern.permute.xlu0 0
    %1053 = vperm.xlu0 %1052, %v1050
    %v1054 = vpop.permute.xlu0 %1053
    %v1056 = vmul.f32 %v1014, %v1054
    %v1057 = vmul.f32 %v1015, %v1054
    %v1058 = vadd.f32 %v1008, %v1056
    %v1059 = vadd.f32 %v1009, %v1057
    %1060 = vrot.lane.b32.xlu0 %v664, 94
    %v1061 = vpop.permute.xlu0 %1060
    %1062 = vrot.lane.b32.xlu0 %v665, 94
    %v1063 = vpop.permute.xlu0 %1062
    %v1064 = vsel %vm436, %v1061, %v1063
    %v1065 = vsel %vm436, %v1063, %v1061
    %s1066 = scalar_lea.vmem %s1, 352
    %v1067 = vld [vmem:[%s1066] sm:$0xff]
    %1069 = vset.pattern.permute.xlu0 0
    %1070 = vperm.xlu0 %1069, %v1067
    %v1071 = vpop.permute.xlu0 %1070
    %v1073 = vmul.f32 %v1064, %v1071
    %v1074 = vmul.f32 %v1065, %v1071
    %v1075 = vadd.f32 %v1025, %v1073
    %v1076 = vadd.f32 %v1026, %v1074
    %s1077 = scalar_lea.vmem %s1, 424
    %v1078 = vld [vmem:[%s1077] sm:$0xff]
    %1080 = vset.pattern.permute.xlu0 0
    %1081 = vperm.xlu0 %1080, %v1078
    %v1082 = vpop.permute.xlu0 %1081
    %v1084 = vmul.f32 %v1064, %v1082
    %v1085 = vmul.f32 %v1065, %v1082
    %v1086 = vadd.f32 %v1036, %v1084
    %v1087 = vadd.f32 %v1037, %v1085
    %s1088 = scalar_lea.vmem %s1, 496
    %v1089 = vld [vmem:[%s1088] sm:$0xff]
    %1091 = vset.pattern.permute.xlu0 0
    %1092 = vperm.xlu0 %1091, %v1089
    %v1093 = vpop.permute.xlu0 %1092
    %v1095 = vmul.f32 %v1064, %v1093
    %v1096 = vmul.f32 %v1065, %v1093
    %v1097 = vadd.f32 %v1047, %v1095
    %v1098 = vadd.f32 %v1048, %v1096
    %s1099 = scalar_lea.vmem %s1, 568
    %v1100 = vld [vmem:[%s1099] sm:$0xff]
    %1102 = vset.pattern.permute.xlu0 0
    %1103 = vperm.xlu0 %1102, %v1100
    %v1104 = vpop.permute.xlu0 %1103
    %v1106 = vmul.f32 %v1064, %v1104
    %v1107 = vmul.f32 %v1065, %v1104
    %v1108 = vadd.f32 %v1058, %v1106
    %v1109 = vadd.f32 %v1059, %v1107
    %v1110 = vsel %vm483, %v1075, 0.0
    %v1111 = vrot.slane %v1110, 4
    %v1112 = vadd.f32 %v1110, %v1111
    %v1113 = vrot.slane %v1112, 2
    %v1114 = vadd.f32 %v1112, %v1113
    %v1115 = vrot.slane %v1114, 1
    %v1116 = vadd.f32 %v1114, %v1115
    %v1117 = vsel %vm483, %v1076, 0.0
    %v1118 = vrot.slane %v1117, 4
    %v1119 = vadd.f32 %v1117, %v1118
    %v1120 = vrot.slane %v1119, 2
    %v1121 = vadd.f32 %v1119, %v1120
    %v1122 = vrot.slane %v1121, 1
    %v1123 = vadd.f32 %v1121, %v1122
    %s1124 = sld [smem:[#allocation2 + $0x4]]
    %v1125 = vstv %s1124
    %v1126 = vadd.f32 %v1116, %v1125
    %v1127 = vadd.f32 %v1123, %v1125
    %v1128 = vsel %vm483, %v1086, 0.0
    %v1129 = vrot.slane %v1128, 4
    %v1130 = vadd.f32 %v1128, %v1129
    %v1131 = vrot.slane %v1130, 2
    %v1132 = vadd.f32 %v1130, %v1131
    %v1133 = vrot.slane %v1132, 1
    %v1134 = vadd.f32 %v1132, %v1133
    %v1135 = vsel %vm483, %v1087, 0.0
    %v1136 = vrot.slane %v1135, 4
    %v1137 = vadd.f32 %v1135, %v1136
    %v1138 = vrot.slane %v1137, 2
    %v1139 = vadd.f32 %v1137, %v1138
    %v1140 = vrot.slane %v1139, 1
    %v1141 = vadd.f32 %v1139, %v1140
    %s1142 = sld [smem:[#allocation2 + $0x5]]
    %v1143 = vstv %s1142
    %v1144 = vadd.f32 %v1134, %v1143
    %v1145 = vadd.f32 %v1141, %v1143
    %v1146 = vsel %vm483, %v1097, 0.0
    %v1147 = vrot.slane %v1146, 4
    %v1148 = vadd.f32 %v1146, %v1147
    %v1149 = vrot.slane %v1148, 2
    %v1150 = vadd.f32 %v1148, %v1149
    %v1151 = vrot.slane %v1150, 1
    %v1152 = vadd.f32 %v1150, %v1151
    %v1153 = vsel %vm483, %v1098, 0.0
    %v1154 = vrot.slane %v1153, 4
    %v1155 = vadd.f32 %v1153, %v1154
    %v1156 = vrot.slane %v1155, 2
    %v1157 = vadd.f32 %v1155, %v1156
    %v1158 = vrot.slane %v1157, 1
    %v1159 = vadd.f32 %v1157, %v1158
    %s1160 = sld [smem:[#allocation2 + $0x6]]
    %v1161 = vstv %s1160
    %v1162 = vadd.f32 %v1152, %v1161
    %v1163 = vadd.f32 %v1159, %v1161
    %v1164 = vsel %vm483, %v1108, 0.0
    %v1165 = vrot.slane %v1164, 4
    %v1166 = vadd.f32 %v1164, %v1165
    %v1167 = vrot.slane %v1166, 2
    %v1168 = vadd.f32 %v1166, %v1167
    %v1169 = vrot.slane %v1168, 1
    %v1170 = vadd.f32 %v1168, %v1169
    %v1171 = vsel %vm483, %v1109, 0.0
    %v1172 = vrot.slane %v1171, 4
    %v1173 = vadd.f32 %v1171, %v1172
    %v1174 = vrot.slane %v1173, 2
    %v1175 = vadd.f32 %v1173, %v1174
    %v1176 = vrot.slane %v1175, 1
    %v1177 = vadd.f32 %v1175, %v1176
    %s1178 = sld [smem:[#allocation2 + $0x7]]
    %v1179 = vstv %s1178
    %v1180 = vadd.f32 %v1170, %v1179
    %v1181 = vadd.f32 %v1177, %v1179
    %v1182 = vsel %vm556, %v1126, %v1144
    %v1183 = vsel %vm556, %v1127, %v1145
    %v1184 = vsel %vm559, %v1182, %v1162
    %v1185 = vsel %vm559, %v1183, %v1163
    %v1186 = vsel %vm562, %v1184, %v1180
    %v1187 = vsel %vm562, %v1185, %v1181
    %v1190 = vrot.slane %v1075, 4
    %v1191 = vrot.slane %v1076, 4
    %v1194 = vsel %vm483, %v1190, 0.0
    %v1195 = vrot.slane %v1194, 4
    %v1196 = vadd.f32 %v1194, %v1195
    %v1197 = vrot.slane %v1196, 2
    %v1198 = vadd.f32 %v1196, %v1197
    %v1199 = vrot.slane %v1198, 1
    %v1200 = vadd.f32 %v1198, %v1199
    %v1201 = vsel %vm483, %v1191, 0.0
    %v1202 = vrot.slane %v1201, 4
    %v1203 = vadd.f32 %v1201, %v1202
    %v1204 = vrot.slane %v1203, 2
    %v1205 = vadd.f32 %v1203, %v1204
    %v1206 = vrot.slane %v1205, 1
    %v1207 = vadd.f32 %v1205, %v1206
    %v1208 = vadd.f32 %v1200, %v1125
    %v1209 = vadd.f32 %v1207, %v1125
    %v1212 = vrot.slane %v1086, 4
    %v1213 = vrot.slane %v1087, 4
    %v1216 = vsel %vm483, %v1212, 0.0
    %v1217 = vrot.slane %v1216, 4
    %v1218 = vadd.f32 %v1216, %v1217
    %v1219 = vrot.slane %v1218, 2
    %v1220 = vadd.f32 %v1218, %v1219
    %v1221 = vrot.slane %v1220, 1
    %v1222 = vadd.f32 %v1220, %v1221
    %v1223 = vsel %vm483, %v1213, 0.0
    %v1224 = vrot.slane %v1223, 4
    %v1225 = vadd.f32 %v1223, %v1224
    %v1226 = vrot.slane %v1225, 2
    %v1227 = vadd.f32 %v1225, %v1226
    %v1228 = vrot.slane %v1227, 1
    %v1229 = vadd.f32 %v1227, %v1228
    %v1230 = vadd.f32 %v1222, %v1143
    %v1231 = vadd.f32 %v1229, %v1143
    %v1234 = vrot.slane %v1097, 4
    %v1235 = vrot.slane %v1098, 4
    %v1238 = vsel %vm483, %v1234, 0.0
    %v1239 = vrot.slane %v1238, 4
    %v1240 = vadd.f32 %v1238, %v1239
    %v1241 = vrot.slane %v1240, 2
    %v1242 = vadd.f32 %v1240, %v1241
    %v1243 = vrot.slane %v1242, 1
    %v1244 = vadd.f32 %v1242, %v1243
    %v1245 = vsel %vm483, %v1235, 0.0
    %v1246 = vrot.slane %v1245, 4
    %v1247 = vadd.f32 %v1245, %v1246
    %v1248 = vrot.slane %v1247, 2
    %v1249 = vadd.f32 %v1247, %v1248
    %v1250 = vrot.slane %v1249, 1
    %v1251 = vadd.f32 %v1249, %v1250
    %v1252 = vadd.f32 %v1244, %v1161
    %v1253 = vadd.f32 %v1251, %v1161
    %v1256 = vrot.slane %v1108, 4
    %v1257 = vrot.slane %v1109, 4
    %v1260 = vsel %vm483, %v1256, 0.0
    %v1261 = vrot.slane %v1260, 4
    %v1262 = vadd.f32 %v1260, %v1261
    %v1263 = vrot.slane %v1262, 2
    %v1264 = vadd.f32 %v1262, %v1263
    %v1265 = vrot.slane %v1264, 1
    %v1266 = vadd.f32 %v1264, %v1265
    %v1267 = vsel %vm483, %v1257, 0.0
    %v1268 = vrot.slane %v1267, 4
    %v1269 = vadd.f32 %v1267, %v1268
    %v1270 = vrot.slane %v1269, 2
    %v1271 = vadd.f32 %v1269, %v1270
    %v1272 = vrot.slane %v1271, 1
    %v1273 = vadd.f32 %v1271, %v1272
    %v1274 = vadd.f32 %v1266, %v1179
    %v1275 = vadd.f32 %v1273, %v1179
    %v1276 = vsel %vm556, %v1208, %v1230
    %v1277 = vsel %vm556, %v1209, %v1231
    %v1278 = vsel %vm559, %v1276, %v1252
    %v1279 = vsel %vm559, %v1277, %v1253
    %v1280 = vsel %vm562, %v1278, %v1274
    %v1281 = vsel %vm562, %v1279, %v1275
    %v1286 = vrot.slane %v1186, 4
    %v1287 = vrot.slane %v1187, 4
    %v1288 = vrot.slane %v1280, 4
    %v1289 = vrot.slane %v1281, 4
    %1294 = vst [vmem:[#allocation5] sm:$0xf0] %v1286
    %1295 = vst [vmem:[#allocation5 + $0x8] sm:$0xf0] %v1287
    %1296 = vst [vmem:[#allocation5 + $0x10] sm:$0xf0] %v1288
    %1297 = vst [vmem:[#allocation5 + $0x18] sm:$0xf0] %v1289
    // Predicated region
    $region18: #{tpu_custom_call.1} parent=1 // pred_check
      _
    $region19: #{tpu_custom_call.1} parent=1 // pred_check_branch
      %1299 = sbr.rel (0) target = $region21
    $region20: #{tpu_custom_call.1} parent=1 // pred_region
      %s1301 = ssub.s32 512, 512
      %1302 = vsyncadd [#allocation3], %s1301
      %s1303 = sshll.u32 [#allocation5], 4
      %s1304 = int_to_ptr.vmem [resolvable:$true] %s1303
      %1309 = dma.vmem_to_hbm [thread:$0]  %s1304, 512, %s3, [#allocation3], 256, 256, 16
    $region21: #{tpu_custom_call.1} parent=1 // pred_fallthru
      _
    // Predicated region
    $region22: #{tpu_custom_call.1} parent=1 // pred_check
      _
    $region23: #{tpu_custom_call.1} parent=1 // pred_check_branch
      %1311 = sbr.rel (0) target = $region25
    $region24: #{tpu_custom_call.1} parent=1 // pred_region
      %1312 = dma.done [#allocation3], 512
    $region25: #{tpu_custom_call.1} parent=1 // pred_fallthru
      _
    %1313 = vsyncpa [#allocation3], 1
    %1314 = vsyncpa [#allocation4], 1

</llo_original>
